<compile_context>
chip_gen: v5e
topology: v5e:2x2
jax: 0.10.0
libtpu: 0.0.40
codegen_flags: <defaults>
</compile_context>

<pallas_src>
import functools

import jax
import jax.numpy as jnp
from jax import lax
from jax.experimental import pallas as pl
from jax.experimental.pallas import tpu as pltpu


def _roll(x, shift, axis):
    """jnp.roll semantics (result[i] = x[(i - shift) mod n]) lowered to an XLU
    lane/sublane rotation.  `shift` is a trace-time int; normalised >= 0."""
    n = x.shape[axis]
    s = int(shift) % n
    if s == 0:
        return x
    return pltpu.roll(x, s, axis)


def _fused_elasticity_kernel(u_ref, out_ref, *, dims, mu, lam):
    """u_ref: (3, Dp, HWp) f32 displacement components, flattened lane-dense and
    zero-padded to (multiple of 8, multiple of 128).  out_ref: (1, 1) f32 SMEM.
    Flat index convention inside a D-row: f = h * W + w."""
    d, h, w = dims
    hw = h * w
    dp, hwp = u_ref.shape[1], u_ref.shape[2]

    # 0.5 * (shape - 1): per-channel scale used by BOTH jacobi passes
    # (channel c is multiplied by shape[c] - 1; the conv window carries the 0.5).
    a = (0.5 * (d - 1), 0.5 * (h - 1), 0.5 * (w - 1))
    # Identity-grid fold: its central difference is constant and only survives
    # on the matching (channel, direction) pair.
    idc = ((d - 1) / (w - 1), 1.0, (w - 1) / (d - 1))

    # ---- iota-based edge masks & replicate-pad multiplicity weights ----------
    d_idx = lax.broadcasted_iota(jnp.int32, (dp, hwp), 0)
    f_idx = lax.broadcasted_iota(jnp.int32, (dp, hwp), 1)
    w_idx = lax.rem(f_idx, w)

    w_lo, w_hi = w_idx == 0, w_idx == w - 1
    h_lo, h_hi = f_idx < w, f_idx >= hw - w          # h_hi also covers lane padding
    d_lo, d_hi = d_idx == 0, d_idx >= d - 1          # d_hi also covers sublane padding

    def axis_weight(lo, hi, is_one, is_penult):
        mult = 1.0 + jnp.where(is_one, 1.0, 0.0) + jnp.where(is_penult, 1.0, 0.0)
        return jnp.where(lo | hi, 0.0, mult)

    wgt = (axis_weight(w_lo, w_hi, w_idx == 1, w_idx == w - 2)
           * axis_weight(h_lo, h_hi, f_idx < 2 * w, f_idx >= hw - 2 * w)
           * axis_weight(d_lo, d_hi, d_idx == 1, d_idx == d - 2)
           * (1.0 / (3.0 * d * h * w))).astype(jnp.float32)

    # spatial direction m: 0 -> W (lane step 1), 1 -> H (lane step w), 2 -> D (sublane)
    steps = ((1, 1), (w, 1), (1, 0))                 # (step, axis)

    def at_plus(x, step, axis):                      # value at index + step
        return _roll(x, -step, axis)

    def at_minus(x, step, axis):                     # value at index - step
        return _roll(x, step, axis)

    def cdiff(x, m):
        step, axis = steps[m]
        return 0.5 * (at_plus(x, step, axis) - at_minus(x, step, axis))

    def clamp_edges(x):
        """Replicate padding in registers: every face voxel takes the value of
        its nearest interior neighbour (composed over the three axes).  Roll
        wrap-around only feeds positions that are overwritten or weight-zero."""
        x = jnp.where(w_lo, at_plus(x, 1, 1), jnp.where(w_hi, at_minus(x, 1, 1), x))
        x = jnp.where(h_lo, at_plus(x, w, 1), jnp.where(h_hi, at_minus(x, w, 1), x))
        x = jnp.where(d_lo, at_plus(x, 1, 0), jnp.where(d_hi, at_minus(x, 1, 0), x))
        return x

    def grad_pad(x, m, const):
        g = cdiff(x, m)
        if const != 0.0:
            g = g + const
        return clamp_edges(g)

    # ---- pass 1: padded first derivatives, folded straight into the six ------
    # ---- strain combinations the stress tensor needs -------------------------
    x = a[0] * u_ref[0]
    dzz = a[0] * grad_pad(x, 0, idc[0])
    pyz = a[1] * grad_pad(x, 1, 0.0)
    pxz = a[2] * grad_pad(x, 2, 0.0)

    x = a[1] * u_ref[1]
    pyz = pyz + a[0] * grad_pad(x, 0, 0.0)
    dyy = a[1] * grad_pad(x, 1, idc[1])
    pxy = a[2] * grad_pad(x, 2, 0.0)

    x = a[2] * u_ref[2]
    pxz = pxz + a[0] * grad_pad(x, 0, 0.0)
    pxy = pxy + a[1] * grad_pad(x, 1, 0.0)
    dxx = a[2] * grad_pad(x, 2, idc[2])

    # ---- pass 2: second derivatives + stress + weighted accumulation ---------
    # TODO(synk): for very large D-tiles recompute dzz/.../pyz per m instead of
    # keeping six full-tile values live across the loop (vreg pressure).
    acc = jnp.zeros((dp, hwp), jnp.float32)
    for m in range(3):
        u_zz = cdiff(dzz, m)
        u_yy = cdiff(dyy, m)
        u_xx = cdiff(dxx, m)
        txy = cdiff(pxy, m)          # = u_xy + u_yx
        txz = cdiff(pxz, m)          # = u_xz + u_zx
        tyz = cdiff(pyz, m)          # = u_yz + u_zy
        # identity-grid contribution of the second pass (diagonal directions).
        if m == 0:
            u_zz = u_zz + idc[0]; txz = txz + idc[0]; tyz = tyz + idc[0]
        elif m == 1:
            u_yy = u_yy + idc[1]; txy = txy + idc[1]; tyz = tyz + idc[1]
        else:
            u_xx = u_xx + idc[2]; txy = txy + idc[2]; txz = txz + idc[2]

        tr = u_xx + u_yy + u_zz
        sq = ((2.0 * mu * u_xx + lam * tr) ** 2
              + (2.0 * mu * u_yy + lam * tr) ** 2
              + (2.0 * mu * u_zz + lam * tr) ** 2
              + (mu * txy) ** 2 + (mu * txz) ** 2 + (mu * tyz) ** 2)
        acc = acc + wgt * sq          # vector accumulate; reduce once below

    out_ref[0, 0] = jnp.sum(acc)


def _vmem_limit_bytes(padded_elems):
    """Per-generation VMEM budget: working set (+headroom) clamped to 3/4 of the
    physical VMEM of this chip (64 MiB on v7x, 128 MiB on v5e/v6e)."""
    need = 14 * padded_elems * 4 + (4 << 20)     # input + live field temporaries
    try:
        phys = int(pltpu.get_tpu_info().vmem_capacity_bytes)
    except Exception:
        phys = 64 << 20
    return int(max(8 << 20, min(need, (phys * 3) // 4)))


def _elastic_energy(u_cf, dims, mu, lam):
    d, h, w = dims
    nvox = d * h * w
    kernel = functools.partial(_fused_elasticity_kernel, dims=dims,
                               mu=float(mu), lam=float(lam))
    return pl.pallas_call(
        kernel,
        out_shape=jax.ShapeDtypeStruct((1, 1), jnp.float32),
        in_specs=[pl.BlockSpec(memory_space=pltpu.MemorySpace.VMEM)],
        out_specs=pl.BlockSpec(memory_space=pltpu.MemorySpace.SMEM),
        compiler_params=pltpu.CompilerParams(
            vmem_limit_bytes=_vmem_limit_bytes(u_cf.size)),
        cost_estimate=pl.CostEstimate(
            flops=420 * nvox, transcendentals=0,
            bytes_accessed=u_cf.size * 4 + 4),
    )(u_cf)


@functools.partial(jax.jit, static_argnames=("mu", "lam"))
def linear_elasticity_forward(u, mu=2.0, lam=1.0):
    """u: [1, D, H, W, 3] displacement field (same layout as the PyTorch module)."""
    n, d, h, w, c = u.shape
    assert n == 1 and c == 3
    assert min(d, h, w) >= 3, "each spatial dim must be >= 3"
    hw = h * w
    # [1, D, H, W, 3] -> [3, D, H*W]: component-major, lane-dense last dim,
    # zero-padded to native (8, 128) tiling (padded voxels get zero weight).
    u_cf = jnp.transpose(u[0], (3, 0, 1, 2)).reshape(3, d, hw).astype(jnp.float32)
    dp = ((d + 7) // 8) * 8
    hwp = ((hw + 127) // 128) * 128
    if (dp, hwp) != (d, hw):
        u_cf = jnp.pad(u_cf, ((0, 0), (0, dp - d), (0, hwp - hw)))
    out = _elastic_energy(u_cf, (d, h, w), mu, lam)
    return out[0, 0]


# ---------------------------------------------------------------------------
# Pure-JAX reference (mirrors the PyTorch code path) for the correctness check
# ---------------------------------------------------------------------------
def _identity_grid_cf(d, h, w, dtype):
    gx = jnp.broadcast_to(jnp.linspace(-1.0, 1.0, w, dtype=dtype)[None, None, :], (d, h, w))
    gy = jnp.broadcast_to(jnp.linspace(-1.0, 1.0, h, dtype=dtype)[None, :, None], (d, h, w))
    gz = jnp.broadcast_to(jnp.linspace(-1.0, 1.0, d, dtype=dtype)[:, None, None], (d, h, w))
    return jnp.stack([gx, gy, gz], axis=0)


def _ref_forward(u, mu, lam):
    n, d, h, w, c = u.shape
    dtype = u.dtype
    id_grid = jnp.transpose(_identity_grid_cf(d, h, w, dtype), (1, 2, 3, 0))[None]
    scale = jnp.array([d - 1, h - 1, w - 1], dtype=dtype)

    def jac(v):
        x = 0.5 * (v + id_grid) * scale                   # [1, D, H, W, 3]
        x = jnp.transpose(x[0], (3, 0, 1, 2))             # [3, D, H, W]
        d_w = 0.5 * (x[:, :, :, 2:] - x[:, :, :, :-2])[:, 1:-1, 1:-1, :]
        d_h = 0.5 * (x[:, :, 2:, :] - x[:, :, :-2, :])[:, 1:-1, :, 1:-1]
        d_d = 0.5 * (x[:, 2:, :, :] - x[:, :-2, :, :])[:, :, 1:-1, 1:-1]
        pad = lambda a: jnp.pad(a, ((0, 0), (1, 1), (1, 1), (1, 1)), mode="edge")
        return jnp.stack([pad(d_w), pad(d_h), pad(d_d)], axis=-1)  # [3, D, H, W, 3]

    g = jac(u)
    u_xz, u_xy, u_xx = jac(g[None, 2])
    u_yz, u_yy, u_yx = jac(g[None, 1])
    u_zz, u_zy, u_zx = jac(g[None, 0])
    e_xy = 0.5 * (u_xy + u_yx)
    e_xz = 0.5 * (u_xz + u_zx)
    e_yz = 0.5 * (u_yz + u_zy)
    tr = u_xx + u_yy + u_zz
    s_xx = 2 * mu * u_xx + lam * tr
    s_xy = 2 * mu * e_xy
    s_xz = 2 * mu * e_xz
    s_yy = 2 * mu * u_yy + lam * tr
    s_yz = 2 * mu * e_yz
    s_zz = 2 * mu * u_zz + lam * tr
    return (s_xx**2 + s_xy**2 + s_xz**2 + s_yy**2 + s_yz**2 + s_zz**2).mean()


if __name__ == "__main__":
    key = jax.random.PRNGKey(0)
    D, H, W = 8, 12, 16
    u = 0.05 * jax.random.normal(key, (1, D, H, W, 3), dtype=jnp.float32)

    out = jax.block_until_ready(linear_elasticity_forward(u, mu=2.0, lam=1.0))
    ref = _ref_forward(u, 2.0, 1.0)

    assert bool(jnp.isfinite(out)), "non-finite result"
    # summation order / grouping differs from the reference (weighted valid-region
    # sum vs. padded mean), so allow a slightly loose fp32 tolerance.
    assert jnp.allclose(out, ref, rtol=1e-3, atol=1e-4), (float(out), float(ref))
    print("KERNEL_OK")
</pallas_src>

<mosaic_0001>
module attributes {stable_mosaic.version = 11 : i64} {
  func.func @_fused_elasticity_kernel(%arg0: memref<3x8x256xf32, #tpu.memory_space<vmem>>, %arg1: memref<1x1xf32, #tpu.memory_space<smem>>) attributes {dimension_semantics = [], scalar_prefetch = 0 : i64, scratch_operands = 0 : i64, tpu.core_type = #tpu.core_type<tc>} {
    %0 = tpu.iota {dimensions = array<i32: 0>} : vector<8x256xi32>
    %1 = tpu.iota {dimensions = array<i32: 1>} : vector<8x256xi32>
    %c16_i32 = arith.constant 16 : i32
    %2 = vector.broadcast %c16_i32 : i32 to vector<8x256xi32>
    %3 = arith.remsi %1, %2 : vector<8x256xi32>
    %c0_i32 = arith.constant 0 : i32
    %4 = vector.broadcast %c0_i32 : i32 to vector<8x256xi32>
    %5 = arith.cmpi eq, %3, %4 : vector<8x256xi32>
    %c15_i32 = arith.constant 15 : i32
    %6 = vector.broadcast %c15_i32 : i32 to vector<8x256xi32>
    %7 = arith.cmpi eq, %3, %6 : vector<8x256xi32>
    %c16_i32_0 = arith.constant 16 : i32
    %8 = vector.broadcast %c16_i32_0 : i32 to vector<8x256xi32>
    %9 = arith.cmpi slt, %1, %8 : vector<8x256xi32>
    %c176_i32 = arith.constant 176 : i32
    %10 = vector.broadcast %c176_i32 : i32 to vector<8x256xi32>
    %11 = arith.cmpi sge, %1, %10 : vector<8x256xi32>
    %c0_i32_1 = arith.constant 0 : i32
    %12 = vector.broadcast %c0_i32_1 : i32 to vector<8x256xi32>
    %13 = arith.cmpi eq, %0, %12 : vector<8x256xi32>
    %c7_i32 = arith.constant 7 : i32
    %14 = vector.broadcast %c7_i32 : i32 to vector<8x256xi32>
    %15 = arith.cmpi sge, %0, %14 : vector<8x256xi32>
    %c1_i32 = arith.constant 1 : i32
    %16 = vector.broadcast %c1_i32 : i32 to vector<8x256xi32>
    %17 = arith.cmpi eq, %3, %16 : vector<8x256xi32>
    %c14_i32 = arith.constant 14 : i32
    %18 = vector.broadcast %c14_i32 : i32 to vector<8x256xi32>
    %19 = arith.cmpi eq, %3, %18 : vector<8x256xi32>
    %cst = arith.constant 1.000000e+00 : f32
    %cst_2 = arith.constant 0.000000e+00 : f32
    %20 = vector.broadcast %cst : f32 to vector<8x256xf32>
    %21 = vector.broadcast %cst_2 : f32 to vector<8x256xf32>
    %22 = arith.select %17, %20, %21 : vector<8x256xi1>, vector<8x256xf32>
    %cst_3 = arith.constant 1.000000e+00 : f32
    %23 = vector.broadcast %cst_3 : f32 to vector<8x256xf32>
    %24 = arith.addf %23, %22 : vector<8x256xf32>
    %cst_4 = arith.constant 1.000000e+00 : f32
    %cst_5 = arith.constant 0.000000e+00 : f32
    %25 = vector.broadcast %cst_4 : f32 to vector<8x256xf32>
    %26 = vector.broadcast %cst_5 : f32 to vector<8x256xf32>
    %27 = arith.select %19, %25, %26 : vector<8x256xi1>, vector<8x256xf32>
    %28 = arith.addf %24, %27 : vector<8x256xf32>
    %29 = arith.ori %5, %7 : vector<8x256xi1>
    %cst_6 = arith.constant 0.000000e+00 : f32
    %30 = vector.broadcast %cst_6 : f32 to vector<8x256xf32>
    %31 = arith.select %29, %30, %28 : vector<8x256xi1>, vector<8x256xf32>
    %c32_i32 = arith.constant 32 : i32
    %32 = vector.broadcast %c32_i32 : i32 to vector<8x256xi32>
    %33 = arith.cmpi slt, %1, %32 : vector<8x256xi32>
    %c160_i32 = arith.constant 160 : i32
    %34 = vector.broadcast %c160_i32 : i32 to vector<8x256xi32>
    %35 = arith.cmpi sge, %1, %34 : vector<8x256xi32>
    %cst_7 = arith.constant 1.000000e+00 : f32
    %cst_8 = arith.constant 0.000000e+00 : f32
    %36 = vector.broadcast %cst_7 : f32 to vector<8x256xf32>
    %37 = vector.broadcast %cst_8 : f32 to vector<8x256xf32>
    %38 = arith.select %33, %36, %37 : vector<8x256xi1>, vector<8x256xf32>
    %cst_9 = arith.constant 1.000000e+00 : f32
    %39 = vector.broadcast %cst_9 : f32 to vector<8x256xf32>
    %40 = arith.addf %39, %38 : vector<8x256xf32>
    %cst_10 = arith.constant 1.000000e+00 : f32
    %cst_11 = arith.constant 0.000000e+00 : f32
    %41 = vector.broadcast %cst_10 : f32 to vector<8x256xf32>
    %42 = vector.broadcast %cst_11 : f32 to vector<8x256xf32>
    %43 = arith.select %35, %41, %42 : vector<8x256xi1>, vector<8x256xf32>
    %44 = arith.addf %40, %43 : vector<8x256xf32>
    %45 = arith.ori %9, %11 : vector<8x256xi1>
    %cst_12 = arith.constant 0.000000e+00 : f32
    %46 = vector.broadcast %cst_12 : f32 to vector<8x256xf32>
    %47 = arith.select %45, %46, %44 : vector<8x256xi1>, vector<8x256xf32>
    %48 = arith.mulf %31, %47 : vector<8x256xf32>
    %c1_i32_13 = arith.constant 1 : i32
    %49 = vector.broadcast %c1_i32_13 : i32 to vector<8x256xi32>
    %50 = arith.cmpi eq, %0, %49 : vector<8x256xi32>
    %c6_i32 = arith.constant 6 : i32
    %51 = vector.broadcast %c6_i32 : i32 to vector<8x256xi32>
    %52 = arith.cmpi eq, %0, %51 : vector<8x256xi32>
    %cst_14 = arith.constant 1.000000e+00 : f32
    %cst_15 = arith.constant 0.000000e+00 : f32
    %53 = vector.broadcast %cst_14 : f32 to vector<8x256xf32>
    %54 = vector.broadcast %cst_15 : f32 to vector<8x256xf32>
    %55 = arith.select %50, %53, %54 : vector<8x256xi1>, vector<8x256xf32>
    %cst_16 = arith.constant 1.000000e+00 : f32
    %56 = vector.broadcast %cst_16 : f32 to vector<8x256xf32>
    %57 = arith.addf %56, %55 : vector<8x256xf32>
    %cst_17 = arith.constant 1.000000e+00 : f32
    %cst_18 = arith.constant 0.000000e+00 : f32
    %58 = vector.broadcast %cst_17 : f32 to vector<8x256xf32>
    %59 = vector.broadcast %cst_18 : f32 to vector<8x256xf32>
    %60 = arith.select %52, %58, %59 : vector<8x256xi1>, vector<8x256xf32>
    %61 = arith.addf %57, %60 : vector<8x256xf32>
    %62 = arith.ori %13, %15 : vector<8x256xi1>
    %cst_19 = arith.constant 0.000000e+00 : f32
    %63 = vector.broadcast %cst_19 : f32 to vector<8x256xf32>
    %64 = arith.select %62, %63, %61 : vector<8x256xi1>, vector<8x256xf32>
    %65 = arith.mulf %48, %64 : vector<8x256xf32>
    %cst_20 = arith.constant 2.17013891E-4 : f32
    %66 = vector.broadcast %cst_20 : f32 to vector<8x256xf32>
    %67 = arith.mulf %65, %66 : vector<8x256xf32>
    %c0 = arith.constant 0 : index
    %c0_21 = arith.constant 0 : index
    %c0_22 = arith.constant 0 : index
    %68 = vector.load %arg0[%c0, %c0_21, %c0_22] : memref<3x8x256xf32, #tpu.memory_space<vmem>>, vector<1x8x256xf32>
    %69 = vector.shape_cast %68 : vector<1x8x256xf32> to vector<8x256xf32>
    %cst_23 = arith.constant 3.500000e+00 : f32
    %70 = vector.broadcast %cst_23 : f32 to vector<8x256xf32>
    %71 = arith.mulf %70, %69 : vector<8x256xf32>
    %c255_i32 = arith.constant 255 : i32
    %72 = tpu.dynamic_rotate %71 by %c255_i32 dim 1 : vector<8x256xf32>, i32 -> vector<8x256xf32>
    %c1_i32_24 = arith.constant 1 : i32
    %73 = tpu.dynamic_rotate %71 by %c1_i32_24 dim 1 : vector<8x256xf32>, i32 -> vector<8x256xf32>
    %74 = arith.subf %72, %73 : vector<8x256xf32>
    %cst_25 = arith.constant 5.000000e-01 : f32
    %75 = vector.broadcast %cst_25 : f32 to vector<8x256xf32>
    %76 = arith.mulf %75, %74 : vector<8x256xf32>
    %cst_26 = arith.constant 0.466666669 : f32
    %77 = vector.broadcast %cst_26 : f32 to vector<8x256xf32>
    %78 = arith.addf %76, %77 : vector<8x256xf32>
    %c255_i32_27 = arith.constant 255 : i32
    %79 = tpu.dynamic_rotate %78 by %c255_i32_27 dim 1 : vector<8x256xf32>, i32 -> vector<8x256xf32>
    %c1_i32_28 = arith.constant 1 : i32
    %80 = tpu.dynamic_rotate %78 by %c1_i32_28 dim 1 : vector<8x256xf32>, i32 -> vector<8x256xf32>
    %81 = arith.select %7, %80, %78 : vector<8x256xi1>, vector<8x256xf32>
    %82 = arith.select %5, %79, %81 : vector<8x256xi1>, vector<8x256xf32>
    %c240_i32 = arith.constant 240 : i32
    %83 = tpu.dynamic_rotate %82 by %c240_i32 dim 1 : vector<8x256xf32>, i32 -> vector<8x256xf32>
    %c16_i32_29 = arith.constant 16 : i32
    %84 = tpu.dynamic_rotate %82 by %c16_i32_29 dim 1 : vector<8x256xf32>, i32 -> vector<8x256xf32>
    %85 = arith.select %11, %84, %82 : vector<8x256xi1>, vector<8x256xf32>
    %86 = arith.select %9, %83, %85 : vector<8x256xi1>, vector<8x256xf32>
    %c7_i32_30 = arith.constant 7 : i32
    %87 = tpu.dynamic_rotate %86 by %c7_i32_30 dim 0 : vector<8x256xf32>, i32 -> vector<8x256xf32>
    %c1_i32_31 = arith.constant 1 : i32
    %88 = tpu.dynamic_rotate %86 by %c1_i32_31 dim 0 : vector<8x256xf32>, i32 -> vector<8x256xf32>
    %89 = arith.select %15, %88, %86 : vector<8x256xi1>, vector<8x256xf32>
    %90 = arith.select %13, %87, %89 : vector<8x256xi1>, vector<8x256xf32>
    %cst_32 = arith.constant 3.500000e+00 : f32
    %91 = vector.broadcast %cst_32 : f32 to vector<8x256xf32>
    %92 = arith.mulf %91, %90 : vector<8x256xf32>
    %c240_i32_33 = arith.constant 240 : i32
    %93 = tpu.dynamic_rotate %71 by %c240_i32_33 dim 1 : vector<8x256xf32>, i32 -> vector<8x256xf32>
    %c16_i32_34 = arith.constant 16 : i32
    %94 = tpu.dynamic_rotate %71 by %c16_i32_34 dim 1 : vector<8x256xf32>, i32 -> vector<8x256xf32>
    %95 = arith.subf %93, %94 : vector<8x256xf32>
    %cst_35 = arith.constant 5.000000e-01 : f32
    %96 = vector.broadcast %cst_35 : f32 to vector<8x256xf32>
    %97 = arith.mulf %96, %95 : vector<8x256xf32>
    %c255_i32_36 = arith.constant 255 : i32
    %98 = tpu.dynamic_rotate %97 by %c255_i32_36 dim 1 : vector<8x256xf32>, i32 -> vector<8x256xf32>
    %c1_i32_37 = arith.constant 1 : i32
    %99 = tpu.dynamic_rotate %97 by %c1_i32_37 dim 1 : vector<8x256xf32>, i32 -> vector<8x256xf32>
    %100 = arith.select %7, %99, %97 : vector<8x256xi1>, vector<8x256xf32>
    %101 = arith.select %5, %98, %100 : vector<8x256xi1>, vector<8x256xf32>
    %c240_i32_38 = arith.constant 240 : i32
    %102 = tpu.dynamic_rotate %101 by %c240_i32_38 dim 1 : vector<8x256xf32>, i32 -> vector<8x256xf32>
    %c16_i32_39 = arith.constant 16 : i32
    %103 = tpu.dynamic_rotate %101 by %c16_i32_39 dim 1 : vector<8x256xf32>, i32 -> vector<8x256xf32>
    %104 = arith.select %11, %103, %101 : vector<8x256xi1>, vector<8x256xf32>
    %105 = arith.select %9, %102, %104 : vector<8x256xi1>, vector<8x256xf32>
    %c7_i32_40 = arith.constant 7 : i32
    %106 = tpu.dynamic_rotate %105 by %c7_i32_40 dim 0 : vector<8x256xf32>, i32 -> vector<8x256xf32>
    %c1_i32_41 = arith.constant 1 : i32
    %107 = tpu.dynamic_rotate %105 by %c1_i32_41 dim 0 : vector<8x256xf32>, i32 -> vector<8x256xf32>
    %108 = arith.select %15, %107, %105 : vector<8x256xi1>, vector<8x256xf32>
    %109 = arith.select %13, %106, %108 : vector<8x256xi1>, vector<8x256xf32>
    %cst_42 = arith.constant 5.500000e+00 : f32
    %110 = vector.broadcast %cst_42 : f32 to vector<8x256xf32>
    %111 = arith.mulf %110, %109 : vector<8x256xf32>
    %c7_i32_43 = arith.constant 7 : i32
    %112 = tpu.dynamic_rotate %71 by %c7_i32_43 dim 0 : vector<8x256xf32>, i32 -> vector<8x256xf32>
    %c1_i32_44 = arith.constant 1 : i32
    %113 = tpu.dynamic_rotate %71 by %c1_i32_44 dim 0 : vector<8x256xf32>, i32 -> vector<8x256xf32>
    %114 = arith.subf %112, %113 : vector<8x256xf32>
    %cst_45 = arith.constant 5.000000e-01 : f32
    %115 = vector.broadcast %cst_45 : f32 to vector<8x256xf32>
    %116 = arith.mulf %115, %114 : vector<8x256xf32>
    %c255_i32_46 = arith.constant 255 : i32
    %117 = tpu.dynamic_rotate %116 by %c255_i32_46 dim 1 : vector<8x256xf32>, i32 -> vector<8x256xf32>
    %c1_i32_47 = arith.constant 1 : i32
    %118 = tpu.dynamic_rotate %116 by %c1_i32_47 dim 1 : vector<8x256xf32>, i32 -> vector<8x256xf32>
    %119 = arith.select %7, %118, %116 : vector<8x256xi1>, vector<8x256xf32>
    %120 = arith.select %5, %117, %119 : vector<8x256xi1>, vector<8x256xf32>
    %c240_i32_48 = arith.constant 240 : i32
    %121 = tpu.dynamic_rotate %120 by %c240_i32_48 dim 1 : vector<8x256xf32>, i32 -> vector<8x256xf32>
    %c16_i32_49 = arith.constant 16 : i32
    %122 = tpu.dynamic_rotate %120 by %c16_i32_49 dim 1 : vector<8x256xf32>, i32 -> vector<8x256xf32>
    %123 = arith.select %11, %122, %120 : vector<8x256xi1>, vector<8x256xf32>
    %124 = arith.select %9, %121, %123 : vector<8x256xi1>, vector<8x256xf32>
    %c7_i32_50 = arith.constant 7 : i32
    %125 = tpu.dynamic_rotate %124 by %c7_i32_50 dim 0 : vector<8x256xf32>, i32 -> vector<8x256xf32>
    %c1_i32_51 = arith.constant 1 : i32
    %126 = tpu.dynamic_rotate %124 by %c1_i32_51 dim 0 : vector<8x256xf32>, i32 -> vector<8x256xf32>
    %127 = arith.select %15, %126, %124 : vector<8x256xi1>, vector<8x256xf32>
    %128 = arith.select %13, %125, %127 : vector<8x256xi1>, vector<8x256xf32>
    %cst_52 = arith.constant 7.500000e+00 : f32
    %129 = vector.broadcast %cst_52 : f32 to vector<8x256xf32>
    %130 = arith.mulf %129, %128 : vector<8x256xf32>
    %c1 = arith.constant 1 : index
    %c0_53 = arith.constant 0 : index
    %c0_54 = arith.constant 0 : index
    %131 = vector.load %arg0[%c1, %c0_53, %c0_54] : memref<3x8x256xf32, #tpu.memory_space<vmem>>, vector<1x8x256xf32>
    %132 = vector.shape_cast %131 : vector<1x8x256xf32> to vector<8x256xf32>
    %cst_55 = arith.constant 5.500000e+00 : f32
    %133 = vector.broadcast %cst_55 : f32 to vector<8x256xf32>
    %134 = arith.mulf %133, %132 : vector<8x256xf32>
    %c255_i32_56 = arith.constant 255 : i32
    %135 = tpu.dynamic_rotate %134 by %c255_i32_56 dim 1 : vector<8x256xf32>, i32 -> vector<8x256xf32>
    %c1_i32_57 = arith.constant 1 : i32
    %136 = tpu.dynamic_rotate %134 by %c1_i32_57 dim 1 : vector<8x256xf32>, i32 -> vector<8x256xf32>
    %137 = arith.subf %135, %136 : vector<8x256xf32>
    %cst_58 = arith.constant 5.000000e-01 : f32
    %138 = vector.broadcast %cst_58 : f32 to vector<8x256xf32>
    %139 = arith.mulf %138, %137 : vector<8x256xf32>
    %c255_i32_59 = arith.constant 255 : i32
    %140 = tpu.dynamic_rotate %139 by %c255_i32_59 dim 1 : vector<8x256xf32>, i32 -> vector<8x256xf32>
    %c1_i32_60 = arith.constant 1 : i32
    %141 = tpu.dynamic_rotate %139 by %c1_i32_60 dim 1 : vector<8x256xf32>, i32 -> vector<8x256xf32>
    %142 = arith.select %7, %141, %139 : vector<8x256xi1>, vector<8x256xf32>
    %143 = arith.select %5, %140, %142 : vector<8x256xi1>, vector<8x256xf32>
    %c240_i32_61 = arith.constant 240 : i32
    %144 = tpu.dynamic_rotate %143 by %c240_i32_61 dim 1 : vector<8x256xf32>, i32 -> vector<8x256xf32>
    %c16_i32_62 = arith.constant 16 : i32
    %145 = tpu.dynamic_rotate %143 by %c16_i32_62 dim 1 : vector<8x256xf32>, i32 -> vector<8x256xf32>
    %146 = arith.select %11, %145, %143 : vector<8x256xi1>, vector<8x256xf32>
    %147 = arith.select %9, %144, %146 : vector<8x256xi1>, vector<8x256xf32>
    %c7_i32_63 = arith.constant 7 : i32
    %148 = tpu.dynamic_rotate %147 by %c7_i32_63 dim 0 : vector<8x256xf32>, i32 -> vector<8x256xf32>
    %c1_i32_64 = arith.constant 1 : i32
    %149 = tpu.dynamic_rotate %147 by %c1_i32_64 dim 0 : vector<8x256xf32>, i32 -> vector<8x256xf32>
    %150 = arith.select %15, %149, %147 : vector<8x256xi1>, vector<8x256xf32>
    %151 = arith.select %13, %148, %150 : vector<8x256xi1>, vector<8x256xf32>
    %cst_65 = arith.constant 3.500000e+00 : f32
    %152 = vector.broadcast %cst_65 : f32 to vector<8x256xf32>
    %153 = arith.mulf %152, %151 : vector<8x256xf32>
    %154 = arith.addf %111, %153 : vector<8x256xf32>
    %c240_i32_66 = arith.constant 240 : i32
    %155 = tpu.dynamic_rotate %134 by %c240_i32_66 dim 1 : vector<8x256xf32>, i32 -> vector<8x256xf32>
    %c16_i32_67 = arith.constant 16 : i32
    %156 = tpu.dynamic_rotate %134 by %c16_i32_67 dim 1 : vector<8x256xf32>, i32 -> vector<8x256xf32>
    %157 = arith.subf %155, %156 : vector<8x256xf32>
    %cst_68 = arith.constant 5.000000e-01 : f32
    %158 = vector.broadcast %cst_68 : f32 to vector<8x256xf32>
    %159 = arith.mulf %158, %157 : vector<8x256xf32>
    %cst_69 = arith.constant 1.000000e+00 : f32
    %160 = vector.broadcast %cst_69 : f32 to vector<8x256xf32>
    %161 = arith.addf %159, %160 : vector<8x256xf32>
    %c255_i32_70 = arith.constant 255 : i32
    %162 = tpu.dynamic_rotate %161 by %c255_i32_70 dim 1 : vector<8x256xf32>, i32 -> vector<8x256xf32>
    %c1_i32_71 = arith.constant 1 : i32
    %163 = tpu.dynamic_rotate %161 by %c1_i32_71 dim 1 : vector<8x256xf32>, i32 -> vector<8x256xf32>
    %164 = arith.select %7, %163, %161 : vector<8x256xi1>, vector<8x256xf32>
    %165 = arith.select %5, %162, %164 : vector<8x256xi1>, vector<8x256xf32>
    %c240_i32_72 = arith.constant 240 : i32
    %166 = tpu.dynamic_rotate %165 by %c240_i32_72 dim 1 : vector<8x256xf32>, i32 -> vector<8x256xf32>
    %c16_i32_73 = arith.constant 16 : i32
    %167 = tpu.dynamic_rotate %165 by %c16_i32_73 dim 1 : vector<8x256xf32>, i32 -> vector<8x256xf32>
    %168 = arith.select %11, %167, %165 : vector<8x256xi1>, vector<8x256xf32>
    %169 = arith.select %9, %166, %168 : vector<8x256xi1>, vector<8x256xf32>
    %c7_i32_74 = arith.constant 7 : i32
    %170 = tpu.dynamic_rotate %169 by %c7_i32_74 dim 0 : vector<8x256xf32>, i32 -> vector<8x256xf32>
    %c1_i32_75 = arith.constant 1 : i32
    %171 = tpu.dynamic_rotate %169 by %c1_i32_75 dim 0 : vector<8x256xf32>, i32 -> vector<8x256xf32>
    %172 = arith.select %15, %171, %169 : vector<8x256xi1>, vector<8x256xf32>
    %173 = arith.select %13, %170, %172 : vector<8x256xi1>, vector<8x256xf32>
    %cst_76 = arith.constant 5.500000e+00 : f32
    %174 = vector.broadcast %cst_76 : f32 to vector<8x256xf32>
    %175 = arith.mulf %174, %173 : vector<8x256xf32>
    %c7_i32_77 = arith.constant 7 : i32
    %176 = tpu.dynamic_rotate %134 by %c7_i32_77 dim 0 : vector<8x256xf32>, i32 -> vector<8x256xf32>
    %c1_i32_78 = arith.constant 1 : i32
    %177 = tpu.dynamic_rotate %134 by %c1_i32_78 dim 0 : vector<8x256xf32>, i32 -> vector<8x256xf32>
    %178 = arith.subf %176, %177 : vector<8x256xf32>
    %cst_79 = arith.constant 5.000000e-01 : f32
    %179 = vector.broadcast %cst_79 : f32 to vector<8x256xf32>
    %180 = arith.mulf %179, %178 : vector<8x256xf32>
    %c255_i32_80 = arith.constant 255 : i32
    %181 = tpu.dynamic_rotate %180 by %c255_i32_80 dim 1 : vector<8x256xf32>, i32 -> vector<8x256xf32>
    %c1_i32_81 = arith.constant 1 : i32
    %182 = tpu.dynamic_rotate %180 by %c1_i32_81 dim 1 : vector<8x256xf32>, i32 -> vector<8x256xf32>
    %183 = arith.select %7, %182, %180 : vector<8x256xi1>, vector<8x256xf32>
    %184 = arith.select %5, %181, %183 : vector<8x256xi1>, vector<8x256xf32>
    %c240_i32_82 = arith.constant 240 : i32
    %185 = tpu.dynamic_rotate %184 by %c240_i32_82 dim 1 : vector<8x256xf32>, i32 -> vector<8x256xf32>
    %c16_i32_83 = arith.constant 16 : i32
    %186 = tpu.dynamic_rotate %184 by %c16_i32_83 dim 1 : vector<8x256xf32>, i32 -> vector<8x256xf32>
    %187 = arith.select %11, %186, %184 : vector<8x256xi1>, vector<8x256xf32>
    %188 = arith.select %9, %185, %187 : vector<8x256xi1>, vector<8x256xf32>
    %c7_i32_84 = arith.constant 7 : i32
    %189 = tpu.dynamic_rotate %188 by %c7_i32_84 dim 0 : vector<8x256xf32>, i32 -> vector<8x256xf32>
    %c1_i32_85 = arith.constant 1 : i32
    %190 = tpu.dynamic_rotate %188 by %c1_i32_85 dim 0 : vector<8x256xf32>, i32 -> vector<8x256xf32>
    %191 = arith.select %15, %190, %188 : vector<8x256xi1>, vector<8x256xf32>
    %192 = arith.select %13, %189, %191 : vector<8x256xi1>, vector<8x256xf32>
    %cst_86 = arith.constant 7.500000e+00 : f32
    %193 = vector.broadcast %cst_86 : f32 to vector<8x256xf32>
    %194 = arith.mulf %193, %192 : vector<8x256xf32>
    %c2 = arith.constant 2 : index
    %c0_87 = arith.constant 0 : index
    %c0_88 = arith.constant 0 : index
    %195 = vector.load %arg0[%c2, %c0_87, %c0_88] : memref<3x8x256xf32, #tpu.memory_space<vmem>>, vector<1x8x256xf32>
    %196 = vector.shape_cast %195 : vector<1x8x256xf32> to vector<8x256xf32>
    %cst_89 = arith.constant 7.500000e+00 : f32
    %197 = vector.broadcast %cst_89 : f32 to vector<8x256xf32>
    %198 = arith.mulf %197, %196 : vector<8x256xf32>
    %c255_i32_90 = arith.constant 255 : i32
    %199 = tpu.dynamic_rotate %198 by %c255_i32_90 dim 1 : vector<8x256xf32>, i32 -> vector<8x256xf32>
    %c1_i32_91 = arith.constant 1 : i32
    %200 = tpu.dynamic_rotate %198 by %c1_i32_91 dim 1 : vector<8x256xf32>, i32 -> vector<8x256xf32>
    %201 = arith.subf %199, %200 : vector<8x256xf32>
    %cst_92 = arith.constant 5.000000e-01 : f32
    %202 = vector.broadcast %cst_92 : f32 to vector<8x256xf32>
    %203 = arith.mulf %202, %201 : vector<8x256xf32>
    %c255_i32_93 = arith.constant 255 : i32
    %204 = tpu.dynamic_rotate %203 by %c255_i32_93 dim 1 : vector<8x256xf32>, i32 -> vector<8x256xf32>
    %c1_i32_94 = arith.constant 1 : i32
    %205 = tpu.dynamic_rotate %203 by %c1_i32_94 dim 1 : vector<8x256xf32>, i32 -> vector<8x256xf32>
    %206 = arith.select %7, %205, %203 : vector<8x256xi1>, vector<8x256xf32>
    %207 = arith.select %5, %204, %206 : vector<8x256xi1>, vector<8x256xf32>
    %c240_i32_95 = arith.constant 240 : i32
    %208 = tpu.dynamic_rotate %207 by %c240_i32_95 dim 1 : vector<8x256xf32>, i32 -> vector<8x256xf32>
    %c16_i32_96 = arith.constant 16 : i32
    %209 = tpu.dynamic_rotate %207 by %c16_i32_96 dim 1 : vector<8x256xf32>, i32 -> vector<8x256xf32>
    %210 = arith.select %11, %209, %207 : vector<8x256xi1>, vector<8x256xf32>
    %211 = arith.select %9, %208, %210 : vector<8x256xi1>, vector<8x256xf32>
    %c7_i32_97 = arith.constant 7 : i32
    %212 = tpu.dynamic_rotate %211 by %c7_i32_97 dim 0 : vector<8x256xf32>, i32 -> vector<8x256xf32>
    %c1_i32_98 = arith.constant 1 : i32
    %213 = tpu.dynamic_rotate %211 by %c1_i32_98 dim 0 : vector<8x256xf32>, i32 -> vector<8x256xf32>
    %214 = arith.select %15, %213, %211 : vector<8x256xi1>, vector<8x256xf32>
    %215 = arith.select %13, %212, %214 : vector<8x256xi1>, vector<8x256xf32>
    %cst_99 = arith.constant 3.500000e+00 : f32
    %216 = vector.broadcast %cst_99 : f32 to vector<8x256xf32>
    %217 = arith.mulf %216, %215 : vector<8x256xf32>
    %218 = arith.addf %130, %217 : vector<8x256xf32>
    %c240_i32_100 = arith.constant 240 : i32
    %219 = tpu.dynamic_rotate %198 by %c240_i32_100 dim 1 : vector<8x256xf32>, i32 -> vector<8x256xf32>
    %c16_i32_101 = arith.constant 16 : i32
    %220 = tpu.dynamic_rotate %198 by %c16_i32_101 dim 1 : vector<8x256xf32>, i32 -> vector<8x256xf32>
    %221 = arith.subf %219, %220 : vector<8x256xf32>
    %cst_102 = arith.constant 5.000000e-01 : f32
    %222 = vector.broadcast %cst_102 : f32 to vector<8x256xf32>
    %223 = arith.mulf %222, %221 : vector<8x256xf32>
    %c255_i32_103 = arith.constant 255 : i32
    %224 = tpu.dynamic_rotate %223 by %c255_i32_103 dim 1 : vector<8x256xf32>, i32 -> vector<8x256xf32>
    %c1_i32_104 = arith.constant 1 : i32
    %225 = tpu.dynamic_rotate %223 by %c1_i32_104 dim 1 : vector<8x256xf32>, i32 -> vector<8x256xf32>
    %226 = arith.select %7, %225, %223 : vector<8x256xi1>, vector<8x256xf32>
    %227 = arith.select %5, %224, %226 : vector<8x256xi1>, vector<8x256xf32>
    %c240_i32_105 = arith.constant 240 : i32
    %228 = tpu.dynamic_rotate %227 by %c240_i32_105 dim 1 : vector<8x256xf32>, i32 -> vector<8x256xf32>
    %c16_i32_106 = arith.constant 16 : i32
    %229 = tpu.dynamic_rotate %227 by %c16_i32_106 dim 1 : vector<8x256xf32>, i32 -> vector<8x256xf32>
    %230 = arith.select %11, %229, %227 : vector<8x256xi1>, vector<8x256xf32>
    %231 = arith.select %9, %228, %230 : vector<8x256xi1>, vector<8x256xf32>
    %c7_i32_107 = arith.constant 7 : i32
    %232 = tpu.dynamic_rotate %231 by %c7_i32_107 dim 0 : vector<8x256xf32>, i32 -> vector<8x256xf32>
    %c1_i32_108 = arith.constant 1 : i32
    %233 = tpu.dynamic_rotate %231 by %c1_i32_108 dim 0 : vector<8x256xf32>, i32 -> vector<8x256xf32>
    %234 = arith.select %15, %233, %231 : vector<8x256xi1>, vector<8x256xf32>
    %235 = arith.select %13, %232, %234 : vector<8x256xi1>, vector<8x256xf32>
    %cst_109 = arith.constant 5.500000e+00 : f32
    %236 = vector.broadcast %cst_109 : f32 to vector<8x256xf32>
    %237 = arith.mulf %236, %235 : vector<8x256xf32>
    %238 = arith.addf %194, %237 : vector<8x256xf32>
    %c7_i32_110 = arith.constant 7 : i32
    %239 = tpu.dynamic_rotate %198 by %c7_i32_110 dim 0 : vector<8x256xf32>, i32 -> vector<8x256xf32>
    %c1_i32_111 = arith.constant 1 : i32
    %240 = tpu.dynamic_rotate %198 by %c1_i32_111 dim 0 : vector<8x256xf32>, i32 -> vector<8x256xf32>
    %241 = arith.subf %239, %240 : vector<8x256xf32>
    %cst_112 = arith.constant 5.000000e-01 : f32
    %242 = vector.broadcast %cst_112 : f32 to vector<8x256xf32>
    %243 = arith.mulf %242, %241 : vector<8x256xf32>
    %cst_113 = arith.constant 2.14285707 : f32
    %244 = vector.broadcast %cst_113 : f32 to vector<8x256xf32>
    %245 = arith.addf %243, %244 : vector<8x256xf32>
    %c255_i32_114 = arith.constant 255 : i32
    %246 = tpu.dynamic_rotate %245 by %c255_i32_114 dim 1 : vector<8x256xf32>, i32 -> vector<8x256xf32>
    %c1_i32_115 = arith.constant 1 : i32
    %247 = tpu.dynamic_rotate %245 by %c1_i32_115 dim 1 : vector<8x256xf32>, i32 -> vector<8x256xf32>
    %248 = arith.select %7, %247, %245 : vector<8x256xi1>, vector<8x256xf32>
    %249 = arith.select %5, %246, %248 : vector<8x256xi1>, vector<8x256xf32>
    %c240_i32_116 = arith.constant 240 : i32
    %250 = tpu.dynamic_rotate %249 by %c240_i32_116 dim 1 : vector<8x256xf32>, i32 -> vector<8x256xf32>
    %c16_i32_117 = arith.constant 16 : i32
    %251 = tpu.dynamic_rotate %249 by %c16_i32_117 dim 1 : vector<8x256xf32>, i32 -> vector<8x256xf32>
    %252 = arith.select %11, %251, %249 : vector<8x256xi1>, vector<8x256xf32>
    %253 = arith.select %9, %250, %252 : vector<8x256xi1>, vector<8x256xf32>
    %c7_i32_118 = arith.constant 7 : i32
    %254 = tpu.dynamic_rotate %253 by %c7_i32_118 dim 0 : vector<8x256xf32>, i32 -> vector<8x256xf32>
    %c1_i32_119 = arith.constant 1 : i32
    %255 = tpu.dynamic_rotate %253 by %c1_i32_119 dim 0 : vector<8x256xf32>, i32 -> vector<8x256xf32>
    %256 = arith.select %15, %255, %253 : vector<8x256xi1>, vector<8x256xf32>
    %257 = arith.select %13, %254, %256 : vector<8x256xi1>, vector<8x256xf32>
    %cst_120 = arith.constant 7.500000e+00 : f32
    %258 = vector.broadcast %cst_120 : f32 to vector<8x256xf32>
    %259 = arith.mulf %258, %257 : vector<8x256xf32>
    %cst_121 = arith.constant 0.000000e+00 : f32
    %260 = vector.broadcast %cst_121 : f32 to vector<8x256xf32>
    %c255_i32_122 = arith.constant 255 : i32
    %261 = tpu.dynamic_rotate %92 by %c255_i32_122 dim 1 : vector<8x256xf32>, i32 -> vector<8x256xf32>
    %c1_i32_123 = arith.constant 1 : i32
    %262 = tpu.dynamic_rotate %92 by %c1_i32_123 dim 1 : vector<8x256xf32>, i32 -> vector<8x256xf32>
    %263 = arith.subf %261, %262 : vector<8x256xf32>
    %cst_124 = arith.constant 5.000000e-01 : f32
    %264 = vector.broadcast %cst_124 : f32 to vector<8x256xf32>
    %265 = arith.mulf %264, %263 : vector<8x256xf32>
    %c255_i32_125 = arith.constant 255 : i32
    %266 = tpu.dynamic_rotate %175 by %c255_i32_125 dim 1 : vector<8x256xf32>, i32 -> vector<8x256xf32>
    %c1_i32_126 = arith.constant 1 : i32
    %267 = tpu.dynamic_rotate %175 by %c1_i32_126 dim 1 : vector<8x256xf32>, i32 -> vector<8x256xf32>
    %268 = arith.subf %266, %267 : vector<8x256xf32>
    %cst_127 = arith.constant 5.000000e-01 : f32
    %269 = vector.broadcast %cst_127 : f32 to vector<8x256xf32>
    %270 = arith.mulf %269, %268 : vector<8x256xf32>
    %c255_i32_128 = arith.constant 255 : i32
    %271 = tpu.dynamic_rotate %259 by %c255_i32_128 dim 1 : vector<8x256xf32>, i32 -> vector<8x256xf32>
    %c1_i32_129 = arith.constant 1 : i32
    %272 = tpu.dynamic_rotate %259 by %c1_i32_129 dim 1 : vector<8x256xf32>, i32 -> vector<8x256xf32>
    %273 = arith.subf %271, %272 : vector<8x256xf32>
    %cst_130 = arith.constant 5.000000e-01 : f32
    %274 = vector.broadcast %cst_130 : f32 to vector<8x256xf32>
    %275 = arith.mulf %274, %273 : vector<8x256xf32>
    %c255_i32_131 = arith.constant 255 : i32
    %276 = tpu.dynamic_rotate %238 by %c255_i32_131 dim 1 : vector<8x256xf32>, i32 -> vector<8x256xf32>
    %c1_i32_132 = arith.constant 1 : i32
    %277 = tpu.dynamic_rotate %238 by %c1_i32_132 dim 1 : vector<8x256xf32>, i32 -> vector<8x256xf32>
    %278 = arith.subf %276, %277 : vector<8x256xf32>
    %cst_133 = arith.constant 5.000000e-01 : f32
    %279 = vector.broadcast %cst_133 : f32 to vector<8x256xf32>
    %280 = arith.mulf %279, %278 : vector<8x256xf32>
    %c255_i32_134 = arith.constant 255 : i32
    %281 = tpu.dynamic_rotate %218 by %c255_i32_134 dim 1 : vector<8x256xf32>, i32 -> vector<8x256xf32>
    %c1_i32_135 = arith.constant 1 : i32
    %282 = tpu.dynamic_rotate %218 by %c1_i32_135 dim 1 : vector<8x256xf32>, i32 -> vector<8x256xf32>
    %283 = arith.subf %281, %282 : vector<8x256xf32>
    %cst_136 = arith.constant 5.000000e-01 : f32
    %284 = vector.broadcast %cst_136 : f32 to vector<8x256xf32>
    %285 = arith.mulf %284, %283 : vector<8x256xf32>
    %c255_i32_137 = arith.constant 255 : i32
    %286 = tpu.dynamic_rotate %154 by %c255_i32_137 dim 1 : vector<8x256xf32>, i32 -> vector<8x256xf32>
    %c1_i32_138 = arith.constant 1 : i32
    %287 = tpu.dynamic_rotate %154 by %c1_i32_138 dim 1 : vector<8x256xf32>, i32 -> vector<8x256xf32>
    %288 = arith.subf %286, %287 : vector<8x256xf32>
    %cst_139 = arith.constant 5.000000e-01 : f32
    %289 = vector.broadcast %cst_139 : f32 to vector<8x256xf32>
    %290 = arith.mulf %289, %288 : vector<8x256xf32>
    %cst_140 = arith.constant 0.466666669 : f32
    %291 = vector.broadcast %cst_140 : f32 to vector<8x256xf32>
    %292 = arith.addf %265, %291 : vector<8x256xf32>
    %cst_141 = arith.constant 0.466666669 : f32
    %293 = vector.broadcast %cst_141 : f32 to vector<8x256xf32>
    %294 = arith.addf %285, %293 : vector<8x256xf32>
    %cst_142 = arith.constant 0.466666669 : f32
    %295 = vector.broadcast %cst_142 : f32 to vector<8x256xf32>
    %296 = arith.addf %290, %295 : vector<8x256xf32>
    %297 = arith.addf %275, %270 : vector<8x256xf32>
    %298 = arith.addf %297, %292 : vector<8x256xf32>
    %cst_143 = arith.constant 4.000000e+00 : f32
    %299 = vector.broadcast %cst_143 : f32 to vector<8x256xf32>
    %300 = arith.mulf %299, %275 : vector<8x256xf32>
    %cst_144 = arith.constant 1.000000e+00 : f32
    %301 = vector.broadcast %cst_144 : f32 to vector<8x256xf32>
    %302 = arith.mulf %301, %298 : vector<8x256xf32>
    %303 = arith.addf %300, %302 : vector<8x256xf32>
    %304 = arith.mulf %303, %303 : vector<8x256xf32>
    %cst_145 = arith.constant 4.000000e+00 : f32
    %305 = vector.broadcast %cst_145 : f32 to vector<8x256xf32>
    %306 = arith.mulf %305, %270 : vector<8x256xf32>
    %cst_146 = arith.constant 1.000000e+00 : f32
    %307 = vector.broadcast %cst_146 : f32 to vector<8x256xf32>
    %308 = arith.mulf %307, %298 : vector<8x256xf32>
    %309 = arith.addf %306, %308 : vector<8x256xf32>
    %310 = arith.mulf %309, %309 : vector<8x256xf32>
    %311 = arith.addf %304, %310 : vector<8x256xf32>
    %cst_147 = arith.constant 4.000000e+00 : f32
    %312 = vector.broadcast %cst_147 : f32 to vector<8x256xf32>
    %313 = arith.mulf %312, %292 : vector<8x256xf32>
    %cst_148 = arith.constant 1.000000e+00 : f32
    %314 = vector.broadcast %cst_148 : f32 to vector<8x256xf32>
    %315 = arith.mulf %314, %298 : vector<8x256xf32>
    %316 = arith.addf %313, %315 : vector<8x256xf32>
    %317 = arith.mulf %316, %316 : vector<8x256xf32>
    %318 = arith.addf %311, %317 : vector<8x256xf32>
    %cst_149 = arith.constant 2.000000e+00 : f32
    %319 = vector.broadcast %cst_149 : f32 to vector<8x256xf32>
    %320 = arith.mulf %319, %280 : vector<8x256xf32>
    %321 = arith.mulf %320, %320 : vector<8x256xf32>
    %322 = arith.addf %318, %321 : vector<8x256xf32>
    %cst_150 = arith.constant 2.000000e+00 : f32
    %323 = vector.broadcast %cst_150 : f32 to vector<8x256xf32>
    %324 = arith.mulf %323, %294 : vector<8x256xf32>
    %325 = arith.mulf %324, %324 : vector<8x256xf32>
    %326 = arith.addf %322, %325 : vector<8x256xf32>
    %cst_151 = arith.constant 2.000000e+00 : f32
    %327 = vector.broadcast %cst_151 : f32 to vector<8x256xf32>
    %328 = arith.mulf %327, %296 : vector<8x256xf32>
    %329 = arith.mulf %328, %328 : vector<8x256xf32>
    %330 = arith.addf %326, %329 : vector<8x256xf32>
    %331 = arith.mulf %67, %330 : vector<8x256xf32>
    %332 = arith.addf %260, %331 : vector<8x256xf32>
    %c240_i32_152 = arith.constant 240 : i32
    %333 = tpu.dynamic_rotate %92 by %c240_i32_152 dim 1 : vector<8x256xf32>, i32 -> vector<8x256xf32>
    %c16_i32_153 = arith.constant 16 : i32
    %334 = tpu.dynamic_rotate %92 by %c16_i32_153 dim 1 : vector<8x256xf32>, i32 -> vector<8x256xf32>
    %335 = arith.subf %333, %334 : vector<8x256xf32>
    %cst_154 = arith.constant 5.000000e-01 : f32
    %336 = vector.broadcast %cst_154 : f32 to vector<8x256xf32>
    %337 = arith.mulf %336, %335 : vector<8x256xf32>
    %c240_i32_155 = arith.constant 240 : i32
    %338 = tpu.dynamic_rotate %175 by %c240_i32_155 dim 1 : vector<8x256xf32>, i32 -> vector<8x256xf32>
    %c16_i32_156 = arith.constant 16 : i32
    %339 = tpu.dynamic_rotate %175 by %c16_i32_156 dim 1 : vector<8x256xf32>, i32 -> vector<8x256xf32>
    %340 = arith.subf %338, %339 : vector<8x256xf32>
    %cst_157 = arith.constant 5.000000e-01 : f32
    %341 = vector.broadcast %cst_157 : f32 to vector<8x256xf32>
    %342 = arith.mulf %341, %340 : vector<8x256xf32>
    %c240_i32_158 = arith.constant 240 : i32
    %343 = tpu.dynamic_rotate %259 by %c240_i32_158 dim 1 : vector<8x256xf32>, i32 -> vector<8x256xf32>
    %c16_i32_159 = arith.constant 16 : i32
    %344 = tpu.dynamic_rotate %259 by %c16_i32_159 dim 1 : vector<8x256xf32>, i32 -> vector<8x256xf32>
    %345 = arith.subf %343, %344 : vector<8x256xf32>
    %cst_160 = arith.constant 5.000000e-01 : f32
    %346 = vector.broadcast %cst_160 : f32 to vector<8x256xf32>
    %347 = arith.mulf %346, %345 : vector<8x256xf32>
    %c240_i32_161 = arith.constant 240 : i32
    %348 = tpu.dynamic_rotate %238 by %c240_i32_161 dim 1 : vector<8x256xf32>, i32 -> vector<8x256xf32>
    %c16_i32_162 = arith.constant 16 : i32
    %349 = tpu.dynamic_rotate %238 by %c16_i32_162 dim 1 : vector<8x256xf32>, i32 -> vector<8x256xf32>
    %350 = arith.subf %348, %349 : vector<8x256xf32>
    %cst_163 = arith.constant 5.000000e-01 : f32
    %351 = vector.broadcast %cst_163 : f32 to vector<8x256xf32>
    %352 = arith.mulf %351, %350 : vector<8x256xf32>
    %c240_i32_164 = arith.constant 240 : i32
    %353 = tpu.dynamic_rotate %218 by %c240_i32_164 dim 1 : vector<8x256xf32>, i32 -> vector<8x256xf32>
    %c16_i32_165 = arith.constant 16 : i32
    %354 = tpu.dynamic_rotate %218 by %c16_i32_165 dim 1 : vector<8x256xf32>, i32 -> vector<8x256xf32>
    %355 = arith.subf %353, %354 : vector<8x256xf32>
    %cst_166 = arith.constant 5.000000e-01 : f32
    %356 = vector.broadcast %cst_166 : f32 to vector<8x256xf32>
    %357 = arith.mulf %356, %355 : vector<8x256xf32>
    %c240_i32_167 = arith.constant 240 : i32
    %358 = tpu.dynamic_rotate %154 by %c240_i32_167 dim 1 : vector<8x256xf32>, i32 -> vector<8x256xf32>
    %c16_i32_168 = arith.constant 16 : i32
    %359 = tpu.dynamic_rotate %154 by %c16_i32_168 dim 1 : vector<8x256xf32>, i32 -> vector<8x256xf32>
    %360 = arith.subf %358, %359 : vector<8x256xf32>
    %cst_169 = arith.constant 5.000000e-01 : f32
    %361 = vector.broadcast %cst_169 : f32 to vector<8x256xf32>
    %362 = arith.mulf %361, %360 : vector<8x256xf32>
    %cst_170 = arith.constant 1.000000e+00 : f32
    %363 = vector.broadcast %cst_170 : f32 to vector<8x256xf32>
    %364 = arith.addf %342, %363 : vector<8x256xf32>
    %cst_171 = arith.constant 1.000000e+00 : f32
    %365 = vector.broadcast %cst_171 : f32 to vector<8x256xf32>
    %366 = arith.addf %352, %365 : vector<8x256xf32>
    %cst_172 = arith.constant 1.000000e+00 : f32
    %367 = vector.broadcast %cst_172 : f32 to vector<8x256xf32>
    %368 = arith.addf %362, %367 : vector<8x256xf32>
    %369 = arith.addf %347, %364 : vector<8x256xf32>
    %370 = arith.addf %369, %337 : vector<8x256xf32>
    %cst_173 = arith.constant 4.000000e+00 : f32
    %371 = vector.broadcast %cst_173 : f32 to vector<8x256xf32>
    %372 = arith.mulf %371, %347 : vector<8x256xf32>
    %cst_174 = arith.constant 1.000000e+00 : f32
    %373 = vector.broadcast %cst_174 : f32 to vector<8x256xf32>
    %374 = arith.mulf %373, %370 : vector<8x256xf32>
    %375 = arith.addf %372, %374 : vector<8x256xf32>
    %376 = arith.mulf %375, %375 : vector<8x256xf32>
    %cst_175 = arith.constant 4.000000e+00 : f32
    %377 = vector.broadcast %cst_175 : f32 to vector<8x256xf32>
    %378 = arith.mulf %377, %364 : vector<8x256xf32>
    %cst_176 = arith.constant 1.000000e+00 : f32
    %379 = vector.broadcast %cst_176 : f32 to vector<8x256xf32>
    %380 = arith.mulf %379, %370 : vector<8x256xf32>
    %381 = arith.addf %378, %380 : vector<8x256xf32>
    %382 = arith.mulf %381, %381 : vector<8x256xf32>
    %383 = arith.addf %376, %382 : vector<8x256xf32>
    %cst_177 = arith.constant 4.000000e+00 : f32
    %384 = vector.broadcast %cst_177 : f32 to vector<8x256xf32>
    %385 = arith.mulf %384, %337 : vector<8x256xf32>
    %cst_178 = arith.constant 1.000000e+00 : f32
    %386 = vector.broadcast %cst_178 : f32 to vector<8x256xf32>
    %387 = arith.mulf %386, %370 : vector<8x256xf32>
    %388 = arith.addf %385, %387 : vector<8x256xf32>
    %389 = arith.mulf %388, %388 : vector<8x256xf32>
    %390 = arith.addf %383, %389 : vector<8x256xf32>
    %cst_179 = arith.constant 2.000000e+00 : f32
    %391 = vector.broadcast %cst_179 : f32 to vector<8x256xf32>
    %392 = arith.mulf %391, %366 : vector<8x256xf32>
    %393 = arith.mulf %392, %392 : vector<8x256xf32>
    %394 = arith.addf %390, %393 : vector<8x256xf32>
    %cst_180 = arith.constant 2.000000e+00 : f32
    %395 = vector.broadcast %cst_180 : f32 to vector<8x256xf32>
    %396 = arith.mulf %395, %357 : vector<8x256xf32>
    %397 = arith.mulf %396, %396 : vector<8x256xf32>
    %398 = arith.addf %394, %397 : vector<8x256xf32>
    %cst_181 = arith.constant 2.000000e+00 : f32
    %399 = vector.broadcast %cst_181 : f32 to vector<8x256xf32>
    %400 = arith.mulf %399, %368 : vector<8x256xf32>
    %401 = arith.mulf %400, %400 : vector<8x256xf32>
    %402 = arith.addf %398, %401 : vector<8x256xf32>
    %403 = arith.mulf %67, %402 : vector<8x256xf32>
    %404 = arith.addf %332, %403 : vector<8x256xf32>
    %c7_i32_182 = arith.constant 7 : i32
    %405 = tpu.dynamic_rotate %92 by %c7_i32_182 dim 0 : vector<8x256xf32>, i32 -> vector<8x256xf32>
    %c1_i32_183 = arith.constant 1 : i32
    %406 = tpu.dynamic_rotate %92 by %c1_i32_183 dim 0 : vector<8x256xf32>, i32 -> vector<8x256xf32>
    %407 = arith.subf %405, %406 : vector<8x256xf32>
    %cst_184 = arith.constant 5.000000e-01 : f32
    %408 = vector.broadcast %cst_184 : f32 to vector<8x256xf32>
    %409 = arith.mulf %408, %407 : vector<8x256xf32>
    %c7_i32_185 = arith.constant 7 : i32
    %410 = tpu.dynamic_rotate %175 by %c7_i32_185 dim 0 : vector<8x256xf32>, i32 -> vector<8x256xf32>
    %c1_i32_186 = arith.constant 1 : i32
    %411 = tpu.dynamic_rotate %175 by %c1_i32_186 dim 0 : vector<8x256xf32>, i32 -> vector<8x256xf32>
    %412 = arith.subf %410, %411 : vector<8x256xf32>
    %cst_187 = arith.constant 5.000000e-01 : f32
    %413 = vector.broadcast %cst_187 : f32 to vector<8x256xf32>
    %414 = arith.mulf %413, %412 : vector<8x256xf32>
    %c7_i32_188 = arith.constant 7 : i32
    %415 = tpu.dynamic_rotate %259 by %c7_i32_188 dim 0 : vector<8x256xf32>, i32 -> vector<8x256xf32>
    %c1_i32_189 = arith.constant 1 : i32
    %416 = tpu.dynamic_rotate %259 by %c1_i32_189 dim 0 : vector<8x256xf32>, i32 -> vector<8x256xf32>
    %417 = arith.subf %415, %416 : vector<8x256xf32>
    %cst_190 = arith.constant 5.000000e-01 : f32
    %418 = vector.broadcast %cst_190 : f32 to vector<8x256xf32>
    %419 = arith.mulf %418, %417 : vector<8x256xf32>
    %c7_i32_191 = arith.constant 7 : i32
    %420 = tpu.dynamic_rotate %238 by %c7_i32_191 dim 0 : vector<8x256xf32>, i32 -> vector<8x256xf32>
    %c1_i32_192 = arith.constant 1 : i32
    %421 = tpu.dynamic_rotate %238 by %c1_i32_192 dim 0 : vector<8x256xf32>, i32 -> vector<8x256xf32>
    %422 = arith.subf %420, %421 : vector<8x256xf32>
    %cst_193 = arith.constant 5.000000e-01 : f32
    %423 = vector.broadcast %cst_193 : f32 to vector<8x256xf32>
    %424 = arith.mulf %423, %422 : vector<8x256xf32>
    %c7_i32_194 = arith.constant 7 : i32
    %425 = tpu.dynamic_rotate %218 by %c7_i32_194 dim 0 : vector<8x256xf32>, i32 -> vector<8x256xf32>
    %c1_i32_195 = arith.constant 1 : i32
    %426 = tpu.dynamic_rotate %218 by %c1_i32_195 dim 0 : vector<8x256xf32>, i32 -> vector<8x256xf32>
    %427 = arith.subf %425, %426 : vector<8x256xf32>
    %cst_196 = arith.constant 5.000000e-01 : f32
    %428 = vector.broadcast %cst_196 : f32 to vector<8x256xf32>
    %429 = arith.mulf %428, %427 : vector<8x256xf32>
    %c7_i32_197 = arith.constant 7 : i32
    %430 = tpu.dynamic_rotate %154 by %c7_i32_197 dim 0 : vector<8x256xf32>, i32 -> vector<8x256xf32>
    %c1_i32_198 = arith.constant 1 : i32
    %431 = tpu.dynamic_rotate %154 by %c1_i32_198 dim 0 : vector<8x256xf32>, i32 -> vector<8x256xf32>
    %432 = arith.subf %430, %431 : vector<8x256xf32>
    %cst_199 = arith.constant 5.000000e-01 : f32
    %433 = vector.broadcast %cst_199 : f32 to vector<8x256xf32>
    %434 = arith.mulf %433, %432 : vector<8x256xf32>
    %cst_200 = arith.constant 2.14285707 : f32
    %435 = vector.broadcast %cst_200 : f32 to vector<8x256xf32>
    %436 = arith.addf %419, %435 : vector<8x256xf32>
    %cst_201 = arith.constant 2.14285707 : f32
    %437 = vector.broadcast %cst_201 : f32 to vector<8x256xf32>
    %438 = arith.addf %424, %437 : vector<8x256xf32>
    %cst_202 = arith.constant 2.14285707 : f32
    %439 = vector.broadcast %cst_202 : f32 to vector<8x256xf32>
    %440 = arith.addf %429, %439 : vector<8x256xf32>
    %441 = arith.addf %436, %414 : vector<8x256xf32>
    %442 = arith.addf %441, %409 : vector<8x256xf32>
    %cst_203 = arith.constant 4.000000e+00 : f32
    %443 = vector.broadcast %cst_203 : f32 to vector<8x256xf32>
    %444 = arith.mulf %443, %436 : vector<8x256xf32>
    %cst_204 = arith.constant 1.000000e+00 : f32
    %445 = vector.broadcast %cst_204 : f32 to vector<8x256xf32>
    %446 = arith.mulf %445, %442 : vector<8x256xf32>
    %447 = arith.addf %444, %446 : vector<8x256xf32>
    %448 = arith.mulf %447, %447 : vector<8x256xf32>
    %cst_205 = arith.constant 4.000000e+00 : f32
    %449 = vector.broadcast %cst_205 : f32 to vector<8x256xf32>
    %450 = arith.mulf %449, %414 : vector<8x256xf32>
    %cst_206 = arith.constant 1.000000e+00 : f32
    %451 = vector.broadcast %cst_206 : f32 to vector<8x256xf32>
    %452 = arith.mulf %451, %442 : vector<8x256xf32>
    %453 = arith.addf %450, %452 : vector<8x256xf32>
    %454 = arith.mulf %453, %453 : vector<8x256xf32>
    %455 = arith.addf %448, %454 : vector<8x256xf32>
    %cst_207 = arith.constant 4.000000e+00 : f32
    %456 = vector.broadcast %cst_207 : f32 to vector<8x256xf32>
    %457 = arith.mulf %456, %409 : vector<8x256xf32>
    %cst_208 = arith.constant 1.000000e+00 : f32
    %458 = vector.broadcast %cst_208 : f32 to vector<8x256xf32>
    %459 = arith.mulf %458, %442 : vector<8x256xf32>
    %460 = arith.addf %457, %459 : vector<8x256xf32>
    %461 = arith.mulf %460, %460 : vector<8x256xf32>
    %462 = arith.addf %455, %461 : vector<8x256xf32>
    %cst_209 = arith.constant 2.000000e+00 : f32
    %463 = vector.broadcast %cst_209 : f32 to vector<8x256xf32>
    %464 = arith.mulf %463, %438 : vector<8x256xf32>
    %465 = arith.mulf %464, %464 : vector<8x256xf32>
    %466 = arith.addf %462, %465 : vector<8x256xf32>
    %cst_210 = arith.constant 2.000000e+00 : f32
    %467 = vector.broadcast %cst_210 : f32 to vector<8x256xf32>
    %468 = arith.mulf %467, %440 : vector<8x256xf32>
    %469 = arith.mulf %468, %468 : vector<8x256xf32>
    %470 = arith.addf %466, %469 : vector<8x256xf32>
    %cst_211 = arith.constant 2.000000e+00 : f32
    %471 = vector.broadcast %cst_211 : f32 to vector<8x256xf32>
    %472 = arith.mulf %471, %434 : vector<8x256xf32>
    %473 = arith.mulf %472, %472 : vector<8x256xf32>
    %474 = arith.addf %470, %473 : vector<8x256xf32>
    %475 = arith.mulf %67, %474 : vector<8x256xf32>
    %476 = arith.addf %404, %475 : vector<8x256xf32>
    %477 = vector.shape_cast %476 : vector<8x256xf32> to vector<1x8x256xf32>
    %cst_212 = arith.constant dense<0.000000e+00> : vector<1xf32>
    %478 = vector.multi_reduction <add>, %477, %cst_212 [1, 2] : vector<1x8x256xf32> to vector<1xf32>
    %479 = vector.shape_cast %478 : vector<1xf32> to vector<1x1x1xf32>
    %480 = vector.extract %479[0, 0, 0] : f32 from vector<1x1x1xf32>
    %c0_213 = arith.constant 0 : index
    %c0_214 = arith.constant 0 : index
    %481 = memref.load %arg1[%c0_213, %c0_214] : memref<1x1xf32, #tpu.memory_space<smem>>
    memref.store %480, %arg1[%c0_213, %c0_214] : memref<1x1xf32, #tpu.memory_space<smem>>
    return
  }
}

</mosaic_0001>

<llo_original>
// kernel: linear_elasticity_forward.1
$region0: #{linear_elasticity_forward.1}
  #allocation0 [shape = 'u32[]', space=smem, size = 0x4, offset = 0x4, fixed_abs, tag = 'smem constant byte address 0x4 - core index']
  #allocation1 [shape = 'u32[72,128]{1,0:T(1,128)}', space=vmem, size = 0x9000, scoped, tag = 'internal scratch']
  %s0 = inlined_call_operand.vmem [shape: f32[3,8,256], index: 0, kind: input, shape index: {}]
  %s1 = inlined_call_operand.hbm [shape: f32[1,1], index: 1, kind: output, shape index: {}]
  %s2 = sld [smem:[#allocation0]]
  $region14: #{linear_elasticity_forward.1} parent=0
    _
  %s4 = ssub.s32 1, %s2
  %s5 = scalar_select 0, %s4, %s2
  $region1: #{linear_elasticity_forward.1} parent=0
    #allocation2 [shape = 'u8[512]{0}', space=smem, size = 0x200, scoped, tag = 'output window, operand 0, single buffered']
    #allocation3 [shape = 's32[1]{0}', space=sflag, size = 0x4, scoped, tag = 'scoped memory for linear_elasticity_forward.1']
    %6 = vsyncpa [#allocation3], 0
    // Predicated region
    $region2: #{linear_elasticity_forward.1} parent=1 // pred_check
      _
    $region3: #{linear_elasticity_forward.1} parent=1 // pred_check_branch
      %8 = sbr.rel (0) target = $region5
    $region4: #{linear_elasticity_forward.1} parent=1 // pred_region
      _
    $region5: #{linear_elasticity_forward.1} parent=1 // pred_fallthru
      _
    %v9 = vlaneseq
    %v10 = vshrl.u32 %v9, 7
    %v11 = vlaneseq
    %v12 = vand.u32 %v11, 127
    %v13 = vadd.s32 %v12, 128
    %vm14 = vcmp.lt.s32.totalorder %v12, 0
    %v15 = vsub.s32 0, %v12
    %v16 = vsel %vm14, %v15, %v12
    %v17 = vshrl.u32 %v16, 4
    %v18 = vand.u32 %v16, 15
    %v19 = vsub.s32 0, %v18
    %v20 = vsel %vm14, %v19, %v18
    %vm21 = vcmp.lt.s32.totalorder %v13, 0
    %v22 = vsub.s32 0, %v13
    %v23 = vsel %vm21, %v22, %v13
    %v24 = vshrl.u32 %v23, 4
    %v25 = vand.u32 %v23, 15
    %v26 = vsub.s32 0, %v25
    %v27 = vsel %vm21, %v26, %v25
    %vm28 = vcmp.eq.s32.totalorder %v20, 0
    %vm29 = vcmp.eq.s32.totalorder %v27, 0
    %vm30 = vcmp.eq.s32.totalorder %v20, 15
    %vm31 = vcmp.eq.s32.totalorder %v27, 15
    %vm32 = vcmp.lt.s32.totalorder %v12, 16
    %vm33 = vcmp.lt.s32.totalorder %v13, 16
    %vm34 = vcmp.ge.s32.totalorder %v12, 176
    %vm35 = vcmp.ge.s32.totalorder %v13, 176
    %vm36 = vcmp.eq.s32.totalorder %v10, 0
    %vm37 = vcmp.ge.s32.totalorder %v10, 7
    %vm38 = vcmp.eq.s32.totalorder %v20, 1
    %vm39 = vcmp.eq.s32.totalorder %v27, 1
    %vm40 = vcmp.eq.s32.totalorder %v20, 14
    %vm41 = vcmp.eq.s32.totalorder %v27, 14
    %v42 = vsel %vm38, 1.0, 0.0
    %v43 = vsel %vm39, 1.0, 0.0
    %v44 = vadd.f32 %v42, 1.0
    %v45 = vadd.f32 %v43, 1.0
    %v46 = vsel %vm40, 1.0, 0.0
    %v47 = vsel %vm41, 1.0, 0.0
    %v48 = vadd.f32 %v44, %v46
    %v49 = vadd.f32 %v45, %v47
    %vm50 = vmor %vm28, %vm30
    %vm51 = vmor %vm29, %vm31
    %v52 = vsel %vm50, 0.0, %v48
    %v53 = vsel %vm51, 0.0, %v49
    %vm54 = vcmp.lt.s32.totalorder %v12, 32
    %vm55 = vcmp.lt.s32.totalorder %v13, 32
    %vm56 = vcmp.ge.s32.totalorder %v12, 160
    %vm57 = vcmp.ge.s32.totalorder %v13, 160
    %v58 = vsel %vm54, 1.0, 0.0
    %v59 = vsel %vm55, 1.0, 0.0
    %v60 = vadd.f32 %v58, 1.0
    %v61 = vadd.f32 %v59, 1.0
    %v62 = vsel %vm56, 1.0, 0.0
    %v63 = vsel %vm57, 1.0, 0.0
    %v64 = vadd.f32 %v60, %v62
    %v65 = vadd.f32 %v61, %v63
    %vm66 = vmor %vm32, %vm34
    %vm67 = vmor %vm33, %vm35
    %v68 = vsel %vm66, 0.0, %v64
    %v69 = vsel %vm67, 0.0, %v65
    %v70 = vmul.f32 %v52, %v68
    %v71 = vmul.f32 %v53, %v69
    %vm72 = vcmp.eq.s32.totalorder %v10, 1
    %vm73 = vcmp.eq.s32.totalorder %v10, 6
    %v74 = vsel %vm72, 1.0, 0.0
    %v75 = vadd.f32 %v74, 1.0
    %v76 = vsel %vm73, 1.0, 0.0
    %v77 = vadd.f32 %v75, %v76
    %vm78 = vmor %vm36, %vm37
    %v79 = vsel %vm78, 0.0, %v77
    %v80 = vmul.f32 %v70, %v79
    %v81 = vmul.f32 %v71, %v79
    %v82 = vmul.f32 %v80, 0.00021701389
    %v83 = vmul.f32 %v81, 0.00021701389
    %v84 = vld [vmem:[%s0] sm:$0xff]
    %v85 = vld [vmem:[%s0 + $0x8] sm:$0xff]
    %v86 = vmul.f32 %v84, 3.5
    %v87 = vmul.f32 %v85, 3.5
    %88 = vrot.lane.b32.xlu0 %v86, 127
    %v89 = vpop.permute.xlu0 %88
    %90 = vrot.lane.b32.xlu0 %v87, 127
    %v91 = vpop.permute.xlu0 %90
    %vm92 = vcmp.lt.s32.totalorder %v12, 127
    %v93 = vsel %vm92, %v89, %v91
    %v94 = vsel %vm92, %v91, %v89
    %95 = vrot.lane.b32.xlu0 %v86, 1
    %v96 = vpop.permute.xlu0 %95
    %97 = vrot.lane.b32.xlu0 %v87, 1
    %v98 = vpop.permute.xlu0 %97
    %vm99 = vcmp.lt.s32.totalorder %v12, 1
    %v100 = vsel %vm99, %v96, %v98
    %v101 = vsel %vm99, %v98, %v96
    %v102 = vsub.f32 %v93, %v101
    %v103 = vsub.f32 %v94, %v100
    %v104 = vmul.f32 %v102, 0.5
    %v105 = vmul.f32 %v103, 0.5
    %v106 = vadd.f32 %v104, 0.46666667
    %v107 = vadd.f32 %v105, 0.46666667
    %108 = vrot.lane.b32.xlu0 %v106, 127
    %v109 = vpop.permute.xlu0 %108
    %110 = vrot.lane.b32.xlu0 %v107, 127
    %v111 = vpop.permute.xlu0 %110
    %v112 = vsel %vm92, %v109, %v111
    %v113 = vsel %vm92, %v111, %v109
    %114 = vrot.lane.b32.xlu0 %v106, 1
    %v115 = vpop.permute.xlu0 %114
    %116 = vrot.lane.b32.xlu0 %v107, 1
    %v117 = vpop.permute.xlu0 %116
    %v118 = vsel %vm99, %v115, %v117
    %v119 = vsel %vm99, %v117, %v115
    %v120 = vsel %vm30, %v119, %v106
    %v121 = vsel %vm31, %v118, %v107
    %v122 = vsel %vm28, %v112, %v120
    %v123 = vsel %vm29, %v113, %v121
    %124 = vrot.lane.b32.xlu0 %v122, 112
    %v125 = vpop.permute.xlu0 %124
    %126 = vrot.lane.b32.xlu0 %v123, 112
    %v127 = vpop.permute.xlu0 %126
    %vm128 = vcmp.lt.s32.totalorder %v12, 112
    %v129 = vsel %vm128, %v125, %v127
    %v130 = vsel %vm128, %v127, %v125
    %131 = vrot.lane.b32.xlu0 %v122, 16
    %v132 = vpop.permute.xlu0 %131
    %133 = vrot.lane.b32.xlu0 %v123, 16
    %v134 = vpop.permute.xlu0 %133
    %v135 = vsel %vm32, %v132, %v134
    %v136 = vsel %vm32, %v134, %v132
    %v137 = vsel %vm34, %v136, %v122
    %v138 = vsel %vm35, %v135, %v123
    %v139 = vsel %vm32, %v129, %v137
    %v140 = vsel %vm33, %v130, %v138
    %v141 = vrot.slane %v139, 1
    %v142 = vrot.slane %v140, 1
    %v143 = vrot.slane %v139, 7
    %v144 = vrot.slane %v140, 7
    %v145 = vsel %vm37, %v143, %v139
    %v146 = vsel %vm37, %v144, %v140
    %v147 = vsel %vm36, %v141, %v145
    %v148 = vsel %vm36, %v142, %v146
    %v149 = vmul.f32 %v147, 3.5
    %v150 = vmul.f32 %v148, 3.5
    %151 = vrot.lane.b32.xlu0 %v86, 112
    %v152 = vpop.permute.xlu0 %151
    %153 = vrot.lane.b32.xlu0 %v87, 112
    %v154 = vpop.permute.xlu0 %153
    %v155 = vsel %vm128, %v152, %v154
    %v156 = vsel %vm128, %v154, %v152
    %157 = vrot.lane.b32.xlu0 %v86, 16
    %v158 = vpop.permute.xlu0 %157
    %159 = vrot.lane.b32.xlu0 %v87, 16
    %v160 = vpop.permute.xlu0 %159
    %v161 = vsel %vm32, %v158, %v160
    %v162 = vsel %vm32, %v160, %v158
    %v163 = vsub.f32 %v155, %v162
    %v164 = vsub.f32 %v156, %v161
    %v165 = vmul.f32 %v163, 0.5
    %v166 = vmul.f32 %v164, 0.5
    %167 = vrot.lane.b32.xlu0 %v165, 127
    %v168 = vpop.permute.xlu0 %167
    %169 = vrot.lane.b32.xlu0 %v166, 127
    %v170 = vpop.permute.xlu0 %169
    %v171 = vsel %vm92, %v168, %v170
    %v172 = vsel %vm92, %v170, %v168
    %173 = vrot.lane.b32.xlu0 %v165, 1
    %v174 = vpop.permute.xlu0 %173
    %175 = vrot.lane.b32.xlu0 %v166, 1
    %v176 = vpop.permute.xlu0 %175
    %v177 = vsel %vm99, %v174, %v176
    %v178 = vsel %vm99, %v176, %v174
    %v179 = vsel %vm30, %v178, %v165
    %v180 = vsel %vm31, %v177, %v166
    %v181 = vsel %vm28, %v171, %v179
    %v182 = vsel %vm29, %v172, %v180
    %183 = vrot.lane.b32.xlu0 %v181, 112
    %v184 = vpop.permute.xlu0 %183
    %185 = vrot.lane.b32.xlu0 %v182, 112
    %v186 = vpop.permute.xlu0 %185
    %v187 = vsel %vm128, %v184, %v186
    %v188 = vsel %vm128, %v186, %v184
    %189 = vrot.lane.b32.xlu0 %v181, 16
    %v190 = vpop.permute.xlu0 %189
    %191 = vrot.lane.b32.xlu0 %v182, 16
    %v192 = vpop.permute.xlu0 %191
    %v193 = vsel %vm32, %v190, %v192
    %v194 = vsel %vm32, %v192, %v190
    %v195 = vsel %vm34, %v194, %v181
    %v196 = vsel %vm35, %v193, %v182
    %v197 = vsel %vm32, %v187, %v195
    %v198 = vsel %vm33, %v188, %v196
    %v199 = vrot.slane %v197, 1
    %v200 = vrot.slane %v198, 1
    %v201 = vrot.slane %v197, 7
    %v202 = vrot.slane %v198, 7
    %v203 = vsel %vm37, %v201, %v197
    %v204 = vsel %vm37, %v202, %v198
    %v205 = vsel %vm36, %v199, %v203
    %v206 = vsel %vm36, %v200, %v204
    %v207 = vmul.f32 %v205, 5.5
    %v208 = vmul.f32 %v206, 5.5
    %v209 = vrot.slane %v86, 1
    %v210 = vrot.slane %v87, 1
    %v211 = vrot.slane %v86, 7
    %v212 = vrot.slane %v87, 7
    %v213 = vsub.f32 %v209, %v211
    %v214 = vsub.f32 %v210, %v212
    %v215 = vmul.f32 %v213, 0.5
    %v216 = vmul.f32 %v214, 0.5
    %217 = vrot.lane.b32.xlu0 %v215, 127
    %v218 = vpop.permute.xlu0 %217
    %219 = vrot.lane.b32.xlu0 %v216, 127
    %v220 = vpop.permute.xlu0 %219
    %v221 = vsel %vm92, %v218, %v220
    %v222 = vsel %vm92, %v220, %v218
    %223 = vrot.lane.b32.xlu0 %v215, 1
    %v224 = vpop.permute.xlu0 %223
    %225 = vrot.lane.b32.xlu0 %v216, 1
    %v226 = vpop.permute.xlu0 %225
    %v227 = vsel %vm99, %v224, %v226
    %v228 = vsel %vm99, %v226, %v224
    %v229 = vsel %vm30, %v228, %v215
    %v230 = vsel %vm31, %v227, %v216
    %v231 = vsel %vm28, %v221, %v229
    %v232 = vsel %vm29, %v222, %v230
    %233 = vrot.lane.b32.xlu0 %v231, 112
    %v234 = vpop.permute.xlu0 %233
    %235 = vrot.lane.b32.xlu0 %v232, 112
    %v236 = vpop.permute.xlu0 %235
    %v237 = vsel %vm128, %v234, %v236
    %v238 = vsel %vm128, %v236, %v234
    %239 = vrot.lane.b32.xlu0 %v231, 16
    %v240 = vpop.permute.xlu0 %239
    %241 = vrot.lane.b32.xlu0 %v232, 16
    %v242 = vpop.permute.xlu0 %241
    %v243 = vsel %vm32, %v240, %v242
    %v244 = vsel %vm32, %v242, %v240
    %v245 = vsel %vm34, %v244, %v231
    %v246 = vsel %vm35, %v243, %v232
    %v247 = vsel %vm32, %v237, %v245
    %v248 = vsel %vm33, %v238, %v246
    %v249 = vrot.slane %v247, 1
    %v250 = vrot.slane %v248, 1
    %v251 = vrot.slane %v247, 7
    %v252 = vrot.slane %v248, 7
    %v253 = vsel %vm37, %v251, %v247
    %v254 = vsel %vm37, %v252, %v248
    %v255 = vsel %vm36, %v249, %v253
    %v256 = vsel %vm36, %v250, %v254
    %v257 = vmul.f32 %v255, 7.5
    %v258 = vmul.f32 %v256, 7.5
    %s259 = scalar_lea.vmem %s0, 16
    %v260 = vld [vmem:[%s259] sm:$0xff]
    %v261 = vld [vmem:[%s259 + $0x8] sm:$0xff]
    %v262 = vmul.f32 %v260, 5.5
    %v263 = vmul.f32 %v261, 5.5
    %264 = vrot.lane.b32.xlu0 %v262, 127
    %v265 = vpop.permute.xlu0 %264
    %266 = vrot.lane.b32.xlu0 %v263, 127
    %v267 = vpop.permute.xlu0 %266
    %v268 = vsel %vm92, %v265, %v267
    %v269 = vsel %vm92, %v267, %v265
    %270 = vrot.lane.b32.xlu0 %v262, 1
    %v271 = vpop.permute.xlu0 %270
    %272 = vrot.lane.b32.xlu0 %v263, 1
    %v273 = vpop.permute.xlu0 %272
    %v274 = vsel %vm99, %v271, %v273
    %v275 = vsel %vm99, %v273, %v271
    %v276 = vsub.f32 %v268, %v275
    %v277 = vsub.f32 %v269, %v274
    %v278 = vmul.f32 %v276, 0.5
    %v279 = vmul.f32 %v277, 0.5
    %280 = vrot.lane.b32.xlu0 %v278, 127
    %v281 = vpop.permute.xlu0 %280
    %282 = vrot.lane.b32.xlu0 %v279, 127
    %v283 = vpop.permute.xlu0 %282
    %v284 = vsel %vm92, %v281, %v283
    %v285 = vsel %vm92, %v283, %v281
    %286 = vrot.lane.b32.xlu0 %v278, 1
    %v287 = vpop.permute.xlu0 %286
    %288 = vrot.lane.b32.xlu0 %v279, 1
    %v289 = vpop.permute.xlu0 %288
    %v290 = vsel %vm99, %v287, %v289
    %v291 = vsel %vm99, %v289, %v287
    %v292 = vsel %vm30, %v291, %v278
    %v293 = vsel %vm31, %v290, %v279
    %v294 = vsel %vm28, %v284, %v292
    %v295 = vsel %vm29, %v285, %v293
    %296 = vrot.lane.b32.xlu0 %v294, 112
    %v297 = vpop.permute.xlu0 %296
    %298 = vrot.lane.b32.xlu0 %v295, 112
    %v299 = vpop.permute.xlu0 %298
    %v300 = vsel %vm128, %v297, %v299
    %v301 = vsel %vm128, %v299, %v297
    %302 = vrot.lane.b32.xlu0 %v294, 16
    %v303 = vpop.permute.xlu0 %302
    %304 = vrot.lane.b32.xlu0 %v295, 16
    %v305 = vpop.permute.xlu0 %304
    %v306 = vsel %vm32, %v303, %v305
    %v307 = vsel %vm32, %v305, %v303
    %v308 = vsel %vm34, %v307, %v294
    %v309 = vsel %vm35, %v306, %v295
    %v310 = vsel %vm32, %v300, %v308
    %v311 = vsel %vm33, %v301, %v309
    %v312 = vrot.slane %v310, 1
    %v313 = vrot.slane %v311, 1
    %v314 = vrot.slane %v310, 7
    %v315 = vrot.slane %v311, 7
    %v316 = vsel %vm37, %v314, %v310
    %v317 = vsel %vm37, %v315, %v311
    %v318 = vsel %vm36, %v312, %v316
    %v319 = vsel %vm36, %v313, %v317
    %v320 = vmul.f32 %v318, 3.5
    %v321 = vmul.f32 %v319, 3.5
    %v322 = vadd.f32 %v207, %v320
    %v323 = vadd.f32 %v208, %v321
    %324 = vrot.lane.b32.xlu0 %v262, 112
    %v325 = vpop.permute.xlu0 %324
    %326 = vrot.lane.b32.xlu0 %v263, 112
    %v327 = vpop.permute.xlu0 %326
    %v328 = vsel %vm128, %v325, %v327
    %v329 = vsel %vm128, %v327, %v325
    %330 = vrot.lane.b32.xlu0 %v262, 16
    %v331 = vpop.permute.xlu0 %330
    %332 = vrot.lane.b32.xlu0 %v263, 16
    %v333 = vpop.permute.xlu0 %332
    %v334 = vsel %vm32, %v331, %v333
    %v335 = vsel %vm32, %v333, %v331
    %v336 = vsub.f32 %v328, %v335
    %v337 = vsub.f32 %v329, %v334
    %v338 = vmul.f32 %v336, 0.5
    %v339 = vmul.f32 %v337, 0.5
    %v340 = vadd.f32 %v338, 1.0
    %v341 = vadd.f32 %v339, 1.0
    %342 = vrot.lane.b32.xlu0 %v340, 127
    %v343 = vpop.permute.xlu0 %342
    %344 = vrot.lane.b32.xlu0 %v341, 127
    %v345 = vpop.permute.xlu0 %344
    %v346 = vsel %vm92, %v343, %v345
    %v347 = vsel %vm92, %v345, %v343
    %348 = vrot.lane.b32.xlu0 %v340, 1
    %v349 = vpop.permute.xlu0 %348
    %350 = vrot.lane.b32.xlu0 %v341, 1
    %v351 = vpop.permute.xlu0 %350
    %v352 = vsel %vm99, %v349, %v351
    %v353 = vsel %vm99, %v351, %v349
    %v354 = vsel %vm30, %v353, %v340
    %v355 = vsel %vm31, %v352, %v341
    %v356 = vsel %vm28, %v346, %v354
    %v357 = vsel %vm29, %v347, %v355
    %358 = vrot.lane.b32.xlu0 %v356, 112
    %v359 = vpop.permute.xlu0 %358
    %360 = vrot.lane.b32.xlu0 %v357, 112
    %v361 = vpop.permute.xlu0 %360
    %v362 = vsel %vm128, %v359, %v361
    %v363 = vsel %vm128, %v361, %v359
    %364 = vrot.lane.b32.xlu0 %v356, 16
    %v365 = vpop.permute.xlu0 %364
    %366 = vrot.lane.b32.xlu0 %v357, 16
    %v367 = vpop.permute.xlu0 %366
    %v368 = vsel %vm32, %v365, %v367
    %v369 = vsel %vm32, %v367, %v365
    %v370 = vsel %vm34, %v369, %v356
    %v371 = vsel %vm35, %v368, %v357
    %v372 = vsel %vm32, %v362, %v370
    %v373 = vsel %vm33, %v363, %v371
    %v374 = vrot.slane %v372, 1
    %v375 = vrot.slane %v373, 1
    %v376 = vrot.slane %v372, 7
    %v377 = vrot.slane %v373, 7
    %v378 = vsel %vm37, %v376, %v372
    %v379 = vsel %vm37, %v377, %v373
    %v380 = vsel %vm36, %v374, %v378
    %v381 = vsel %vm36, %v375, %v379
    %v382 = vmul.f32 %v380, 5.5
    %v383 = vmul.f32 %v381, 5.5
    %v384 = vrot.slane %v262, 1
    %v385 = vrot.slane %v263, 1
    %v386 = vrot.slane %v262, 7
    %v387 = vrot.slane %v263, 7
    %v388 = vsub.f32 %v384, %v386
    %v389 = vsub.f32 %v385, %v387
    %v390 = vmul.f32 %v388, 0.5
    %v391 = vmul.f32 %v389, 0.5
    %392 = vrot.lane.b32.xlu0 %v390, 127
    %v393 = vpop.permute.xlu0 %392
    %394 = vrot.lane.b32.xlu0 %v391, 127
    %v395 = vpop.permute.xlu0 %394
    %v396 = vsel %vm92, %v393, %v395
    %v397 = vsel %vm92, %v395, %v393
    %398 = vrot.lane.b32.xlu0 %v390, 1
    %v399 = vpop.permute.xlu0 %398
    %400 = vrot.lane.b32.xlu0 %v391, 1
    %v401 = vpop.permute.xlu0 %400
    %v402 = vsel %vm99, %v399, %v401
    %v403 = vsel %vm99, %v401, %v399
    %v404 = vsel %vm30, %v403, %v390
    %v405 = vsel %vm31, %v402, %v391
    %v406 = vsel %vm28, %v396, %v404
    %v407 = vsel %vm29, %v397, %v405
    %408 = vrot.lane.b32.xlu0 %v406, 112
    %v409 = vpop.permute.xlu0 %408
    %410 = vrot.lane.b32.xlu0 %v407, 112
    %v411 = vpop.permute.xlu0 %410
    %v412 = vsel %vm128, %v409, %v411
    %v413 = vsel %vm128, %v411, %v409
    %414 = vrot.lane.b32.xlu0 %v406, 16
    %v415 = vpop.permute.xlu0 %414
    %416 = vrot.lane.b32.xlu0 %v407, 16
    %v417 = vpop.permute.xlu0 %416
    %v418 = vsel %vm32, %v415, %v417
    %v419 = vsel %vm32, %v417, %v415
    %v420 = vsel %vm34, %v419, %v406
    %v421 = vsel %vm35, %v418, %v407
    %v422 = vsel %vm32, %v412, %v420
    %v423 = vsel %vm33, %v413, %v421
    %v424 = vrot.slane %v422, 1
    %v425 = vrot.slane %v423, 1
    %v426 = vrot.slane %v422, 7
    %v427 = vrot.slane %v423, 7
    %v428 = vsel %vm37, %v426, %v422
    %v429 = vsel %vm37, %v427, %v423
    %v430 = vsel %vm36, %v424, %v428
    %v431 = vsel %vm36, %v425, %v429
    %v432 = vmul.f32 %v430, 7.5
    %v433 = vmul.f32 %v431, 7.5
    %s434 = scalar_lea.vmem %s0, 32
    %v435 = vld [vmem:[%s434] sm:$0xff]
    %v436 = vld [vmem:[%s434 + $0x8] sm:$0xff]
    %v437 = vmul.f32 %v435, 7.5
    %v438 = vmul.f32 %v436, 7.5
    %439 = vrot.lane.b32.xlu0 %v437, 127
    %v440 = vpop.permute.xlu0 %439
    %441 = vrot.lane.b32.xlu0 %v438, 127
    %v442 = vpop.permute.xlu0 %441
    %v443 = vsel %vm92, %v440, %v442
    %v444 = vsel %vm92, %v442, %v440
    %445 = vrot.lane.b32.xlu0 %v437, 1
    %v446 = vpop.permute.xlu0 %445
    %447 = vrot.lane.b32.xlu0 %v438, 1
    %v448 = vpop.permute.xlu0 %447
    %v449 = vsel %vm99, %v446, %v448
    %v450 = vsel %vm99, %v448, %v446
    %v451 = vsub.f32 %v443, %v450
    %v452 = vsub.f32 %v444, %v449
    %v453 = vmul.f32 %v451, 0.5
    %v454 = vmul.f32 %v452, 0.5
    %455 = vrot.lane.b32.xlu0 %v453, 127
    %v456 = vpop.permute.xlu0 %455
    %457 = vrot.lane.b32.xlu0 %v454, 127
    %v458 = vpop.permute.xlu0 %457
    %v459 = vsel %vm92, %v456, %v458
    %v460 = vsel %vm92, %v458, %v456
    %461 = vrot.lane.b32.xlu0 %v453, 1
    %v462 = vpop.permute.xlu0 %461
    %463 = vrot.lane.b32.xlu0 %v454, 1
    %v464 = vpop.permute.xlu0 %463
    %v465 = vsel %vm99, %v462, %v464
    %v466 = vsel %vm99, %v464, %v462
    %v467 = vsel %vm30, %v466, %v453
    %v468 = vsel %vm31, %v465, %v454
    %v469 = vsel %vm28, %v459, %v467
    %v470 = vsel %vm29, %v460, %v468
    %471 = vrot.lane.b32.xlu0 %v469, 112
    %v472 = vpop.permute.xlu0 %471
    %473 = vrot.lane.b32.xlu0 %v470, 112
    %v474 = vpop.permute.xlu0 %473
    %v475 = vsel %vm128, %v472, %v474
    %v476 = vsel %vm128, %v474, %v472
    %477 = vrot.lane.b32.xlu0 %v469, 16
    %v478 = vpop.permute.xlu0 %477
    %479 = vrot.lane.b32.xlu0 %v470, 16
    %v480 = vpop.permute.xlu0 %479
    %v481 = vsel %vm32, %v478, %v480
    %v482 = vsel %vm32, %v480, %v478
    %v483 = vsel %vm34, %v482, %v469
    %v484 = vsel %vm35, %v481, %v470
    %v485 = vsel %vm32, %v475, %v483
    %v486 = vsel %vm33, %v476, %v484
    %v487 = vrot.slane %v485, 1
    %v488 = vrot.slane %v486, 1
    %v489 = vrot.slane %v485, 7
    %v490 = vrot.slane %v486, 7
    %v491 = vsel %vm37, %v489, %v485
    %v492 = vsel %vm37, %v490, %v486
    %v493 = vsel %vm36, %v487, %v491
    %v494 = vsel %vm36, %v488, %v492
    %v495 = vmul.f32 %v493, 3.5
    %v496 = vmul.f32 %v494, 3.5
    %v497 = vadd.f32 %v257, %v495
    %v498 = vadd.f32 %v258, %v496
    %499 = vrot.lane.b32.xlu0 %v437, 112
    %v500 = vpop.permute.xlu0 %499
    %501 = vrot.lane.b32.xlu0 %v438, 112
    %v502 = vpop.permute.xlu0 %501
    %v503 = vsel %vm128, %v500, %v502
    %v504 = vsel %vm128, %v502, %v500
    %505 = vrot.lane.b32.xlu0 %v437, 16
    %v506 = vpop.permute.xlu0 %505
    %507 = vrot.lane.b32.xlu0 %v438, 16
    %v508 = vpop.permute.xlu0 %507
    %v509 = vsel %vm32, %v506, %v508
    %v510 = vsel %vm32, %v508, %v506
    %v511 = vsub.f32 %v503, %v510
    %v512 = vsub.f32 %v504, %v509
    %v513 = vmul.f32 %v511, 0.5
    %v514 = vmul.f32 %v512, 0.5
    %515 = vrot.lane.b32.xlu0 %v513, 127
    %v516 = vpop.permute.xlu0 %515
    %517 = vrot.lane.b32.xlu0 %v514, 127
    %v518 = vpop.permute.xlu0 %517
    %v519 = vsel %vm92, %v516, %v518
    %v520 = vsel %vm92, %v518, %v516
    %521 = vrot.lane.b32.xlu0 %v513, 1
    %v522 = vpop.permute.xlu0 %521
    %523 = vrot.lane.b32.xlu0 %v514, 1
    %v524 = vpop.permute.xlu0 %523
    %v525 = vsel %vm99, %v522, %v524
    %v526 = vsel %vm99, %v524, %v522
    %v527 = vsel %vm30, %v526, %v513
    %v528 = vsel %vm31, %v525, %v514
    %v529 = vsel %vm28, %v519, %v527
    %v530 = vsel %vm29, %v520, %v528
    %531 = vrot.lane.b32.xlu0 %v529, 112
    %v532 = vpop.permute.xlu0 %531
    %533 = vrot.lane.b32.xlu0 %v530, 112
    %v534 = vpop.permute.xlu0 %533
    %v535 = vsel %vm128, %v532, %v534
    %v536 = vsel %vm128, %v534, %v532
    %537 = vrot.lane.b32.xlu0 %v529, 16
    %v538 = vpop.permute.xlu0 %537
    %539 = vrot.lane.b32.xlu0 %v530, 16
    %v540 = vpop.permute.xlu0 %539
    %v541 = vsel %vm32, %v538, %v540
    %v542 = vsel %vm32, %v540, %v538
    %v543 = vsel %vm34, %v542, %v529
    %v544 = vsel %vm35, %v541, %v530
    %v545 = vsel %vm32, %v535, %v543
    %v546 = vsel %vm33, %v536, %v544
    %v547 = vrot.slane %v545, 1
    %v548 = vrot.slane %v546, 1
    %v549 = vrot.slane %v545, 7
    %v550 = vrot.slane %v546, 7
    %v551 = vsel %vm37, %v549, %v545
    %v552 = vsel %vm37, %v550, %v546
    %v553 = vsel %vm36, %v547, %v551
    %v554 = vsel %vm36, %v548, %v552
    %v555 = vmul.f32 %v553, 5.5
    %v556 = vmul.f32 %v554, 5.5
    %v557 = vadd.f32 %v432, %v555
    %v558 = vadd.f32 %v433, %v556
    %v559 = vrot.slane %v437, 1
    %v560 = vrot.slane %v438, 1
    %v561 = vrot.slane %v437, 7
    %v562 = vrot.slane %v438, 7
    %v563 = vsub.f32 %v559, %v561
    %v564 = vsub.f32 %v560, %v562
    %v565 = vmul.f32 %v563, 0.5
    %v566 = vmul.f32 %v564, 0.5
    %v567 = vadd.f32 %v565, 2.142857
    %v568 = vadd.f32 %v566, 2.142857
    %569 = vrot.lane.b32.xlu0 %v567, 127
    %v570 = vpop.permute.xlu0 %569
    %571 = vrot.lane.b32.xlu0 %v568, 127
    %v572 = vpop.permute.xlu0 %571
    %v573 = vsel %vm92, %v570, %v572
    %v574 = vsel %vm92, %v572, %v570
    %575 = vrot.lane.b32.xlu0 %v567, 1
    %v576 = vpop.permute.xlu0 %575
    %577 = vrot.lane.b32.xlu0 %v568, 1
    %v578 = vpop.permute.xlu0 %577
    %v579 = vsel %vm99, %v576, %v578
    %v580 = vsel %vm99, %v578, %v576
    %v581 = vsel %vm30, %v580, %v567
    %v582 = vsel %vm31, %v579, %v568
    %v583 = vsel %vm28, %v573, %v581
    %v584 = vsel %vm29, %v574, %v582
    %585 = vrot.lane.b32.xlu0 %v583, 112
    %v586 = vpop.permute.xlu0 %585
    %587 = vrot.lane.b32.xlu0 %v584, 112
    %v588 = vpop.permute.xlu0 %587
    %v589 = vsel %vm128, %v586, %v588
    %v590 = vsel %vm128, %v588, %v586
    %591 = vrot.lane.b32.xlu0 %v583, 16
    %v592 = vpop.permute.xlu0 %591
    %593 = vrot.lane.b32.xlu0 %v584, 16
    %v594 = vpop.permute.xlu0 %593
    %v595 = vsel %vm32, %v592, %v594
    %v596 = vsel %vm32, %v594, %v592
    %v597 = vsel %vm34, %v596, %v583
    %v598 = vsel %vm35, %v595, %v584
    %v599 = vsel %vm32, %v589, %v597
    %v600 = vsel %vm33, %v590, %v598
    %v601 = vrot.slane %v599, 1
    %v602 = vrot.slane %v600, 1
    %v603 = vrot.slane %v599, 7
    %v604 = vrot.slane %v600, 7
    %v605 = vsel %vm37, %v603, %v599
    %v606 = vsel %vm37, %v604, %v600
    %v607 = vsel %vm36, %v601, %v605
    %v608 = vsel %vm36, %v602, %v606
    %v609 = vmul.f32 %v607, 7.5
    %v610 = vmul.f32 %v608, 7.5
    %611 = vrot.lane.b32.xlu0 %v149, 127
    %v612 = vpop.permute.xlu0 %611
    %613 = vrot.lane.b32.xlu0 %v150, 127
    %v614 = vpop.permute.xlu0 %613
    %v615 = vsel %vm92, %v612, %v614
    %v616 = vsel %vm92, %v614, %v612
    %617 = vrot.lane.b32.xlu0 %v149, 1
    %v618 = vpop.permute.xlu0 %617
    %619 = vrot.lane.b32.xlu0 %v150, 1
    %v620 = vpop.permute.xlu0 %619
    %v621 = vsel %vm99, %v618, %v620
    %v622 = vsel %vm99, %v620, %v618
    %v623 = vsub.f32 %v615, %v622
    %v624 = vsub.f32 %v616, %v621
    %v625 = vmul.f32 %v623, 0.5
    %v626 = vmul.f32 %v624, 0.5
    %627 = vrot.lane.b32.xlu0 %v382, 127
    %v628 = vpop.permute.xlu0 %627
    %629 = vrot.lane.b32.xlu0 %v383, 127
    %v630 = vpop.permute.xlu0 %629
    %v631 = vsel %vm92, %v628, %v630
    %v632 = vsel %vm92, %v630, %v628
    %633 = vrot.lane.b32.xlu0 %v382, 1
    %v634 = vpop.permute.xlu0 %633
    %635 = vrot.lane.b32.xlu0 %v383, 1
    %v636 = vpop.permute.xlu0 %635
    %v637 = vsel %vm99, %v634, %v636
    %v638 = vsel %vm99, %v636, %v634
    %v639 = vsub.f32 %v631, %v638
    %v640 = vsub.f32 %v632, %v637
    %v641 = vmul.f32 %v639, 0.5
    %v642 = vmul.f32 %v640, 0.5
    %643 = vrot.lane.b32.xlu0 %v609, 127
    %v644 = vpop.permute.xlu0 %643
    %645 = vrot.lane.b32.xlu0 %v610, 127
    %v646 = vpop.permute.xlu0 %645
    %v647 = vsel %vm92, %v644, %v646
    %v648 = vsel %vm92, %v646, %v644
    %649 = vrot.lane.b32.xlu0 %v609, 1
    %v650 = vpop.permute.xlu0 %649
    %651 = vrot.lane.b32.xlu0 %v610, 1
    %v652 = vpop.permute.xlu0 %651
    %v653 = vsel %vm99, %v650, %v652
    %v654 = vsel %vm99, %v652, %v650
    %v655 = vsub.f32 %v647, %v654
    %v656 = vsub.f32 %v648, %v653
    %v657 = vmul.f32 %v655, 0.5
    %v658 = vmul.f32 %v656, 0.5
    %659 = vrot.lane.b32.xlu0 %v557, 127
    %v660 = vpop.permute.xlu0 %659
    %661 = vrot.lane.b32.xlu0 %v558, 127
    %v662 = vpop.permute.xlu0 %661
    %v663 = vsel %vm92, %v660, %v662
    %v664 = vsel %vm92, %v662, %v660
    %665 = vrot.lane.b32.xlu0 %v557, 1
    %v666 = vpop.permute.xlu0 %665
    %667 = vrot.lane.b32.xlu0 %v558, 1
    %v668 = vpop.permute.xlu0 %667
    %v669 = vsel %vm99, %v666, %v668
    %v670 = vsel %vm99, %v668, %v666
    %v671 = vsub.f32 %v663, %v670
    %v672 = vsub.f32 %v664, %v669
    %v673 = vmul.f32 %v671, 0.5
    %v674 = vmul.f32 %v672, 0.5
    %675 = vrot.lane.b32.xlu0 %v497, 127
    %v676 = vpop.permute.xlu0 %675
    %677 = vrot.lane.b32.xlu0 %v498, 127
    %v678 = vpop.permute.xlu0 %677
    %v679 = vsel %vm92, %v676, %v678
    %v680 = vsel %vm92, %v678, %v676
    %681 = vrot.lane.b32.xlu0 %v497, 1
    %v682 = vpop.permute.xlu0 %681
    %683 = vrot.lane.b32.xlu0 %v498, 1
    %v684 = vpop.permute.xlu0 %683
    %v685 = vsel %vm99, %v682, %v684
    %v686 = vsel %vm99, %v684, %v682
    %v687 = vsub.f32 %v679, %v686
    %v688 = vsub.f32 %v680, %v685
    %v689 = vmul.f32 %v687, 0.5
    %v690 = vmul.f32 %v688, 0.5
    %691 = vrot.lane.b32.xlu0 %v322, 127
    %v692 = vpop.permute.xlu0 %691
    %693 = vrot.lane.b32.xlu0 %v323, 127
    %v694 = vpop.permute.xlu0 %693
    %v695 = vsel %vm92, %v692, %v694
    %v696 = vsel %vm92, %v694, %v692
    %697 = vrot.lane.b32.xlu0 %v322, 1
    %v698 = vpop.permute.xlu0 %697
    %699 = vrot.lane.b32.xlu0 %v323, 1
    %v700 = vpop.permute.xlu0 %699
    %v701 = vsel %vm99, %v698, %v700
    %v702 = vsel %vm99, %v700, %v698
    %v703 = vsub.f32 %v695, %v702
    %v704 = vsub.f32 %v696, %v701
    %v705 = vmul.f32 %v703, 0.5
    %v706 = vmul.f32 %v704, 0.5
    %v707 = vadd.f32 %v625, 0.46666667
    %v708 = vadd.f32 %v626, 0.46666667
    %v709 = vadd.f32 %v689, 0.46666667
    %v710 = vadd.f32 %v690, 0.46666667
    %v711 = vadd.f32 %v705, 0.46666667
    %v712 = vadd.f32 %v706, 0.46666667
    %v713 = vadd.f32 %v657, %v641
    %v714 = vadd.f32 %v658, %v642
    %v715 = vadd.f32 %v713, %v707
    %v716 = vadd.f32 %v714, %v708
    %v717 = vmul.f32 %v657, 4.0
    %v718 = vmul.f32 %v658, 4.0
    %v719 = vadd.f32 %v717, %v715
    %v720 = vadd.f32 %v718, %v716
    %v721 = vmul.f32 %v719, %v719
    %v722 = vmul.f32 %v720, %v720
    %v723 = vmul.f32 %v641, 4.0
    %v724 = vmul.f32 %v642, 4.0
    %v725 = vadd.f32 %v723, %v715
    %v726 = vadd.f32 %v724, %v716
    %v727 = vmul.f32 %v725, %v725
    %v728 = vmul.f32 %v726, %v726
    %v729 = vadd.f32 %v721, %v727
    %v730 = vadd.f32 %v722, %v728
    %v731 = vmul.f32 %v707, 4.0
    %v732 = vmul.f32 %v708, 4.0
    %v733 = vadd.f32 %v731, %v715
    %v734 = vadd.f32 %v732, %v716
    %v735 = vmul.f32 %v733, %v733
    %v736 = vmul.f32 %v734, %v734
    %v737 = vadd.f32 %v729, %v735
    %v738 = vadd.f32 %v730, %v736
    %v739 = vmul.f32 %v673, 2.0
    %v740 = vmul.f32 %v674, 2.0
    %v741 = vmul.f32 %v739, %v739
    %v742 = vmul.f32 %v740, %v740
    %v743 = vadd.f32 %v737, %v741
    %v744 = vadd.f32 %v738, %v742
    %v745 = vmul.f32 %v709, 2.0
    %v746 = vmul.f32 %v710, 2.0
    %v747 = vmul.f32 %v745, %v745
    %v748 = vmul.f32 %v746, %v746
    %v749 = vadd.f32 %v743, %v747
    %v750 = vadd.f32 %v744, %v748
    %v751 = vmul.f32 %v711, 2.0
    %v752 = vmul.f32 %v712, 2.0
    %v753 = vmul.f32 %v751, %v751
    %v754 = vmul.f32 %v752, %v752
    %v755 = vadd.f32 %v749, %v753
    %v756 = vadd.f32 %v750, %v754
    %v757 = vmul.f32 %v82, %v755
    %v758 = vmul.f32 %v83, %v756
    %v759 = vadd.f32 %v757, 0.0
    %v760 = vadd.f32 %v758, 0.0
    %761 = vrot.lane.b32.xlu0 %v149, 112
    %v762 = vpop.permute.xlu0 %761
    %763 = vrot.lane.b32.xlu0 %v150, 112
    %v764 = vpop.permute.xlu0 %763
    %v765 = vsel %vm128, %v762, %v764
    %v766 = vsel %vm128, %v764, %v762
    %767 = vrot.lane.b32.xlu0 %v149, 16
    %v768 = vpop.permute.xlu0 %767
    %769 = vrot.lane.b32.xlu0 %v150, 16
    %v770 = vpop.permute.xlu0 %769
    %v771 = vsel %vm32, %v768, %v770
    %v772 = vsel %vm32, %v770, %v768
    %v773 = vsub.f32 %v765, %v772
    %v774 = vsub.f32 %v766, %v771
    %v775 = vmul.f32 %v773, 0.5
    %v776 = vmul.f32 %v774, 0.5
    %777 = vrot.lane.b32.xlu0 %v382, 112
    %v778 = vpop.permute.xlu0 %777
    %779 = vrot.lane.b32.xlu0 %v383, 112
    %v780 = vpop.permute.xlu0 %779
    %v781 = vsel %vm128, %v778, %v780
    %v782 = vsel %vm128, %v780, %v778
    %783 = vrot.lane.b32.xlu0 %v382, 16
    %v784 = vpop.permute.xlu0 %783
    %785 = vrot.lane.b32.xlu0 %v383, 16
    %v786 = vpop.permute.xlu0 %785
    %v787 = vsel %vm32, %v784, %v786
    %v788 = vsel %vm32, %v786, %v784
    %v789 = vsub.f32 %v781, %v788
    %v790 = vsub.f32 %v782, %v787
    %v791 = vmul.f32 %v789, 0.5
    %v792 = vmul.f32 %v790, 0.5
    %793 = vrot.lane.b32.xlu0 %v609, 112
    %v794 = vpop.permute.xlu0 %793
    %795 = vrot.lane.b32.xlu0 %v610, 112
    %v796 = vpop.permute.xlu0 %795
    %v797 = vsel %vm128, %v794, %v796
    %v798 = vsel %vm128, %v796, %v794
    %799 = vrot.lane.b32.xlu0 %v609, 16
    %v800 = vpop.permute.xlu0 %799
    %801 = vrot.lane.b32.xlu0 %v610, 16
    %v802 = vpop.permute.xlu0 %801
    %v803 = vsel %vm32, %v800, %v802
    %v804 = vsel %vm32, %v802, %v800
    %v805 = vsub.f32 %v797, %v804
    %v806 = vsub.f32 %v798, %v803
    %v807 = vmul.f32 %v805, 0.5
    %v808 = vmul.f32 %v806, 0.5
    %809 = vrot.lane.b32.xlu0 %v557, 112
    %v810 = vpop.permute.xlu0 %809
    %811 = vrot.lane.b32.xlu0 %v558, 112
    %v812 = vpop.permute.xlu0 %811
    %v813 = vsel %vm128, %v810, %v812
    %v814 = vsel %vm128, %v812, %v810
    %815 = vrot.lane.b32.xlu0 %v557, 16
    %v816 = vpop.permute.xlu0 %815
    %817 = vrot.lane.b32.xlu0 %v558, 16
    %v818 = vpop.permute.xlu0 %817
    %v819 = vsel %vm32, %v816, %v818
    %v820 = vsel %vm32, %v818, %v816
    %v821 = vsub.f32 %v813, %v820
    %v822 = vsub.f32 %v814, %v819
    %v823 = vmul.f32 %v821, 0.5
    %v824 = vmul.f32 %v822, 0.5
    %825 = vrot.lane.b32.xlu0 %v497, 112
    %v826 = vpop.permute.xlu0 %825
    %827 = vrot.lane.b32.xlu0 %v498, 112
    %v828 = vpop.permute.xlu0 %827
    %v829 = vsel %vm128, %v826, %v828
    %v830 = vsel %vm128, %v828, %v826
    %831 = vrot.lane.b32.xlu0 %v497, 16
    %v832 = vpop.permute.xlu0 %831
    %833 = vrot.lane.b32.xlu0 %v498, 16
    %v834 = vpop.permute.xlu0 %833
    %v835 = vsel %vm32, %v832, %v834
    %v836 = vsel %vm32, %v834, %v832
    %v837 = vsub.f32 %v829, %v836
    %v838 = vsub.f32 %v830, %v835
    %v839 = vmul.f32 %v837, 0.5
    %v840 = vmul.f32 %v838, 0.5
    %841 = vrot.lane.b32.xlu0 %v322, 112
    %v842 = vpop.permute.xlu0 %841
    %843 = vrot.lane.b32.xlu0 %v323, 112
    %v844 = vpop.permute.xlu0 %843
    %v845 = vsel %vm128, %v842, %v844
    %v846 = vsel %vm128, %v844, %v842
    %847 = vrot.lane.b32.xlu0 %v322, 16
    %v848 = vpop.permute.xlu0 %847
    %849 = vrot.lane.b32.xlu0 %v323, 16
    %v850 = vpop.permute.xlu0 %849
    %v851 = vsel %vm32, %v848, %v850
    %v852 = vsel %vm32, %v850, %v848
    %v853 = vsub.f32 %v845, %v852
    %v854 = vsub.f32 %v846, %v851
    %v855 = vmul.f32 %v853, 0.5
    %v856 = vmul.f32 %v854, 0.5
    %v857 = vadd.f32 %v791, 1.0
    %v858 = vadd.f32 %v792, 1.0
    %v859 = vadd.f32 %v823, 1.0
    %v860 = vadd.f32 %v824, 1.0
    %v861 = vadd.f32 %v855, 1.0
    %v862 = vadd.f32 %v856, 1.0
    %v863 = vadd.f32 %v807, %v857
    %v864 = vadd.f32 %v808, %v858
    %v865 = vadd.f32 %v863, %v775
    %v866 = vadd.f32 %v864, %v776
    %v867 = vmul.f32 %v807, 4.0
    %v868 = vmul.f32 %v808, 4.0
    %v869 = vadd.f32 %v867, %v865
    %v870 = vadd.f32 %v868, %v866
    %v871 = vmul.f32 %v869, %v869
    %v872 = vmul.f32 %v870, %v870
    %v873 = vmul.f32 %v857, 4.0
    %v874 = vmul.f32 %v858, 4.0
    %v875 = vadd.f32 %v873, %v865
    %v876 = vadd.f32 %v874, %v866
    %v877 = vmul.f32 %v875, %v875
    %v878 = vmul.f32 %v876, %v876
    %v879 = vadd.f32 %v871, %v877
    %v880 = vadd.f32 %v872, %v878
    %v881 = vmul.f32 %v775, 4.0
    %v882 = vmul.f32 %v776, 4.0
    %v883 = vadd.f32 %v881, %v865
    %v884 = vadd.f32 %v882, %v866
    %v885 = vmul.f32 %v883, %v883
    %v886 = vmul.f32 %v884, %v884
    %v887 = vadd.f32 %v879, %v885
    %v888 = vadd.f32 %v880, %v886
    %v889 = vmul.f32 %v859, 2.0
    %v890 = vmul.f32 %v860, 2.0
    %v891 = vmul.f32 %v889, %v889
    %v892 = vmul.f32 %v890, %v890
    %v893 = vadd.f32 %v887, %v891
    %v894 = vadd.f32 %v888, %v892
    %v895 = vmul.f32 %v839, 2.0
    %v896 = vmul.f32 %v840, 2.0
    %v897 = vmul.f32 %v895, %v895
    %v898 = vmul.f32 %v896, %v896
    %v899 = vadd.f32 %v893, %v897
    %v900 = vadd.f32 %v894, %v898
    %v901 = vmul.f32 %v861, 2.0
    %v902 = vmul.f32 %v862, 2.0
    %v903 = vmul.f32 %v901, %v901
    %v904 = vmul.f32 %v902, %v902
    %v905 = vadd.f32 %v899, %v903
    %v906 = vadd.f32 %v900, %v904
    %v907 = vmul.f32 %v82, %v905
    %v908 = vmul.f32 %v83, %v906
    %v909 = vadd.f32 %v759, %v907
    %v910 = vadd.f32 %v760, %v908
    %v911 = vrot.slane %v149, 1
    %v912 = vrot.slane %v150, 1
    %v913 = vrot.slane %v149, 7
    %v914 = vrot.slane %v150, 7
    %v915 = vsub.f32 %v911, %v913
    %v916 = vsub.f32 %v912, %v914
    %v917 = vmul.f32 %v915, 0.5
    %v918 = vmul.f32 %v916, 0.5
    %v919 = vrot.slane %v382, 1
    %v920 = vrot.slane %v383, 1
    %v921 = vrot.slane %v382, 7
    %v922 = vrot.slane %v383, 7
    %v923 = vsub.f32 %v919, %v921
    %v924 = vsub.f32 %v920, %v922
    %v925 = vmul.f32 %v923, 0.5
    %v926 = vmul.f32 %v924, 0.5
    %v927 = vrot.slane %v609, 1
    %v928 = vrot.slane %v610, 1
    %v929 = vrot.slane %v609, 7
    %v930 = vrot.slane %v610, 7
    %v931 = vsub.f32 %v927, %v929
    %v932 = vsub.f32 %v928, %v930
    %v933 = vmul.f32 %v931, 0.5
    %v934 = vmul.f32 %v932, 0.5
    %v935 = vrot.slane %v557, 1
    %v936 = vrot.slane %v558, 1
    %v937 = vrot.slane %v557, 7
    %v938 = vrot.slane %v558, 7
    %v939 = vsub.f32 %v935, %v937
    %v940 = vsub.f32 %v936, %v938
    %v941 = vmul.f32 %v939, 0.5
    %v942 = vmul.f32 %v940, 0.5
    %v943 = vrot.slane %v497, 1
    %v944 = vrot.slane %v498, 1
    %v945 = vrot.slane %v497, 7
    %v946 = vrot.slane %v498, 7
    %v947 = vsub.f32 %v943, %v945
    %v948 = vsub.f32 %v944, %v946
    %v949 = vmul.f32 %v947, 0.5
    %v950 = vmul.f32 %v948, 0.5
    %v951 = vrot.slane %v322, 1
    %v952 = vrot.slane %v323, 1
    %v953 = vrot.slane %v322, 7
    %v954 = vrot.slane %v323, 7
    %v955 = vsub.f32 %v951, %v953
    %v956 = vsub.f32 %v952, %v954
    %v957 = vmul.f32 %v955, 0.5
    %v958 = vmul.f32 %v956, 0.5
    %v959 = vadd.f32 %v933, 2.142857
    %v960 = vadd.f32 %v934, 2.142857
    %v961 = vadd.f32 %v941, 2.142857
    %v962 = vadd.f32 %v942, 2.142857
    %v963 = vadd.f32 %v949, 2.142857
    %v964 = vadd.f32 %v950, 2.142857
    %v965 = vadd.f32 %v959, %v925
    %v966 = vadd.f32 %v960, %v926
    %v967 = vadd.f32 %v965, %v917
    %v968 = vadd.f32 %v966, %v918
    %v969 = vmul.f32 %v959, 4.0
    %v970 = vmul.f32 %v960, 4.0
    %v971 = vadd.f32 %v969, %v967
    %v972 = vadd.f32 %v970, %v968
    %v973 = vmul.f32 %v971, %v971
    %v974 = vmul.f32 %v972, %v972
    %v975 = vmul.f32 %v925, 4.0
    %v976 = vmul.f32 %v926, 4.0
    %v977 = vadd.f32 %v975, %v967
    %v978 = vadd.f32 %v976, %v968
    %v979 = vmul.f32 %v977, %v977
    %v980 = vmul.f32 %v978, %v978
    %v981 = vadd.f32 %v973, %v979
    %v982 = vadd.f32 %v974, %v980
    %v983 = vmul.f32 %v917, 4.0
    %v984 = vmul.f32 %v918, 4.0
    %v985 = vadd.f32 %v983, %v967
    %v986 = vadd.f32 %v984, %v968
    %v987 = vmul.f32 %v985, %v985
    %v988 = vmul.f32 %v986, %v986
    %v989 = vadd.f32 %v981, %v987
    %v990 = vadd.f32 %v982, %v988
    %v991 = vmul.f32 %v961, 2.0
    %v992 = vmul.f32 %v962, 2.0
    %v993 = vmul.f32 %v991, %v991
    %v994 = vmul.f32 %v992, %v992
    %v995 = vadd.f32 %v989, %v993
    %v996 = vadd.f32 %v990, %v994
    %v997 = vmul.f32 %v963, 2.0
    %v998 = vmul.f32 %v964, 2.0
    %v999 = vmul.f32 %v997, %v997
    %v1000 = vmul.f32 %v998, %v998
    %v1001 = vadd.f32 %v995, %v999
    %v1002 = vadd.f32 %v996, %v1000
    %v1003 = vmul.f32 %v957, 2.0
    %v1004 = vmul.f32 %v958, 2.0
    %v1005 = vmul.f32 %v1003, %v1003
    %v1006 = vmul.f32 %v1004, %v1004
    %v1007 = vadd.f32 %v1001, %v1005
    %v1008 = vadd.f32 %v1002, %v1006
    %v1009 = vmul.f32 %v82, %v1007
    %v1010 = vmul.f32 %v83, %v1008
    %v1011 = vadd.f32 %v909, %v1009
    %v1012 = vadd.f32 %v910, %v1010
    %v1013 = vadd.f32 %v1011, %v1012
    %1014 = vadd.xlane.f32.xlu0 %v1013
    %v1015 = vpop.xlane.xlu0 %1014
    %v1016 = vrot.slane %v1015, 4
    %v1017 = vadd.f32 %v1015, %v1016
    %v1018 = vrot.slane %v1017, 2
    %v1019 = vadd.f32 %v1017, %v1018
    %v1020 = vrot.slane %v1019, 1
    %v1021 = vadd.f32 %v1019, %v1020
    %s1022 = vtos %v1021
    %s1023 = scalar_lea.smem [#allocation2], 0
    %1024 = sst [smem:[%s1023]] %s1022
    // Predicated region
    $region6: #{linear_elasticity_forward.1} parent=1 // pred_check
      _
    $region7: #{linear_elasticity_forward.1} parent=1 // pred_check_branch
      %1026 = sbr.rel (0) target = $region9
    $region8: #{linear_elasticity_forward.1} parent=1 // pred_region
      %1028 = vsyncadd [#allocation3], 0
      %s1030 = sshll.u32 %s1, 4
      %s1031 = int_to_ptr.hbm [resolvable:$true] %s1030
      %1033 = dma.smem_to_hbm [#allocation2], 16, %s1031, [#allocation3]
    $region9: #{linear_elasticity_forward.1} parent=1 // pred_fallthru
      _
    // Predicated region
    $region10: #{linear_elasticity_forward.1} parent=1 // pred_check
      _
    $region11: #{linear_elasticity_forward.1} parent=1 // pred_check_branch
      %1035 = sbr.rel (0) target = $region13
    $region12: #{linear_elasticity_forward.1} parent=1 // pred_region
      %1037 = dma.done [#allocation3], 16
    $region13: #{linear_elasticity_forward.1} parent=1 // pred_fallthru
      _
    %1038 = sfence
    %1039 = vsyncpa [#allocation3], 1

</llo_original>
